<compile_context>
chip_gen: v6e
topology: v6e:2x2x1
jax: 0.10.0
libtpu: 0.0.40
codegen_flags: <defaults>
</compile_context>

<pallas_src>
import functools

import jax
import jax.numpy as jnp
from jax import lax
from jax.experimental import pallas as pl
from jax.experimental.pallas import tpu as pltpu

HIDDEN = 32    # hidden_size H
VOCAB = 16     # input_size (vocabulary) V
SEQ_LEN = 8    # T
BATCH = 2      # B (padded to 8 sublanes inside the wrapper)


def encoder_rnn_kernel(tok_ref, h0_ref, slab_ref, out_ref, hout_ref, *,
                       H, V, T, Bp, offs):
    """Whole-sequence bidirectional GRU + fc1 in one kernel invocation.

    tok_ref : (T*Bp, 2) int32  col 0 = token at time t, col 1 = token at T-1-t
    h0_ref  : (Bp, 2H)  f32    [h_fwd | h_bwd]
    slab_ref: (R, 6H)   f32    packed weights / biases (see pack_params)
    out_ref : (T*Bp, H) f32    fc1(concat(fwd, bwd)) per (t, b) row
    hout_ref: (Bp, 2H)  f32    final hidden [h_fwd | h_bwd]
    """
    f32 = jnp.float32
    H2, H6 = 2 * H, 6 * H
    TB = T * Bp

    # ---- Weights / biases, sliced once from the single packed slab (all
    # section starts are multiples of 8 sublanes).
    w_tok_ih = slab_ref[offs['wih']:offs['wih'] + 2 * V, :]          # (2V, 6H)
    whh = slab_ref[offs['whh']:offs['whh'] + H2, :]                  # (2H, 6H) block-diag
    bih = slab_ref[offs['bih']:offs['bih'] + 1, :]                   # (1, 6H) b_ih + b_hh[r,z]
    bhn = jnp.broadcast_to(slab_ref[offs['bhn']:offs['bhn'] + 1, :H2],
                           (Bp, H2))                                 # hoisted broadcast
    fcw = slab_ref[offs['fcw']:offs['fcw'] + H2, :H]                 # (2H, H)
    fcb = slab_ref[offs['fcb']:offs['fcb'] + 1, :H]                  # (1, H)

    # ---- Input-side projections for ALL timesteps & BOTH directions in one
    # MXU dot.  The embedding table is pre-folded into w_tok_ih, so the lhs is
    # just a (TB, 2V) one-hot: columns 0:V select the forward-time token,
    # columns V:2V the reversed-time token.  Row group t then carries
    # [r_f r_b | z_f z_b | n_f n_b] for fwd time t / bwd time T-1-t.
    ids = tok_ref[...]                                               # (TB, 2)
    iota = lax.broadcasted_iota(jnp.int32, (TB, 2 * V), 1)
    tgt = jnp.where(iota < V, ids[:, 0:1], ids[:, 1:2] + V)
    onehot = (iota == tgt).astype(f32)                               # (TB, 2V)
    gi_all = jnp.dot(onehot, w_tok_ih, preferred_element_type=f32) + bih

    # ---- Recurrence, fully unrolled (T static & small).  One block-diagonal
    # dot per step handles both directions; gate slices start at lane 0/64/128.
    h = h0_ref[...]                                                  # (Bp, 2H) [h_f | h_b]
    hs = []
    for t in range(T):
        gh = jnp.dot(h, whh, preferred_element_type=f32)             # (Bp, 6H)
        gi = gi_all[t * Bp:(t + 1) * Bp, :]                          # sublane-aligned slice
        r = jax.nn.sigmoid(gi[:, :H2] + gh[:, :H2])
        z = jax.nn.sigmoid(gi[:, H2:2 * H2] + gh[:, H2:2 * H2])
        n = jnp.tanh(gi[:, 2 * H2:] + r * (gh[:, 2 * H2:] + bhn))
        h = (1.0 - z) * n + z * h
        hs.append(h)

    # ---- Re-associate per-time outputs: the fwd half of iteration t and the
    # bwd half of iteration T-1-t both belong to output time t.  Whole-vreg
    # lane select, then one fc1 dot over the full (TB, 2H) slab at the end.
    lane_is_fwd = lax.broadcasted_iota(jnp.int32, (Bp, H2), 1) < H
    hcat = jnp.concatenate(
        [jnp.where(lane_is_fwd, hs[t], hs[T - 1 - t]) for t in range(T)], axis=0)
    out_ref[...] = jnp.dot(hcat, fcw, preferred_element_type=f32) + fcb
    hout_ref[...] = h                                                # final [h_f | h_b]


def make_params(key, hidden=HIDDEN, vocab=VOCAB):
    """Parameters in the original PyTorch layout (used by the reference)."""
    H, V = hidden, vocab
    ks = jax.random.split(key, 11)

    def u(k, shape, fan_in):
        s = 1.0 / jnp.sqrt(jnp.float32(fan_in))
        return jax.random.uniform(k, shape, jnp.float32, -s, s)

    return dict(
        emb=jax.random.normal(ks[0], (V, H), jnp.float32),
        w_ih_f=u(ks[1], (3 * H, H), H), w_hh_f=u(ks[2], (3 * H, H), H),
        b_ih_f=u(ks[3], (3 * H,), H),   b_hh_f=u(ks[4], (3 * H,), H),
        w_ih_b=u(ks[5], (3 * H, H), H), w_hh_b=u(ks[6], (3 * H, H), H),
        b_ih_b=u(ks[7], (3 * H,), H),   b_hh_b=u(ks[8], (3 * H,), H),
        fc_w=u(ks[9], (H, 2 * H), 2 * H), fc_b=u(ks[10], (H,), 2 * H),
    )


def pack_params(p):
    """One-time packing (hoisted out of the per-call path):
      - gate columns interleaved [r_f r_b | z_f z_b | n_f n_b],
      - embedding folded into the input projection (onehot -> gi in one dot),
      - block-diagonal (2H, 6H) recurrent weight slab,
      - b_hh[r], b_hh[z] folded into the input-side bias (exact),
      - everything concatenated into ONE pre-padded f32 slab (one DMA)."""
    H = p['fc_b'].shape[0]
    V = p['emb'].shape[0]
    H2, H6 = 2 * H, 6 * H

    def gate_cols(w_t, d):
        # w_t: (in, 3H) = [r|z|n] -> (in, 6H) at interleaved positions, dir d.
        out = jnp.zeros((w_t.shape[0], H6), jnp.float32)
        for g in range(3):
            out = out.at[:, (2 * g + d) * H:(2 * g + d + 1) * H].set(
                w_t[:, g * H:(g + 1) * H])
        return out

    def gate_vec(v, d):
        out = jnp.zeros((H6,), jnp.float32)
        for g in range(3):
            out = out.at[(2 * g + d) * H:(2 * g + d + 1) * H].set(
                v[g * H:(g + 1) * H])
        return out

    # Embedding folded into the input projection; rows 0:V = fwd, V:2V = bwd.
    w_tok_ih = jnp.concatenate([p['emb'] @ gate_cols(p['w_ih_f'].T, 0),
                                p['emb'] @ gate_cols(p['w_ih_b'].T, 1)], axis=0)
    # Block-diagonal recurrent weights: rows 0:H act on h_f, rows H:2H on h_b.
    whh_blk = jnp.concatenate([gate_cols(p['w_hh_f'].T, 0),
                               gate_cols(p['w_hh_b'].T, 1)], axis=0)

    bih = gate_vec(p['b_ih_f'], 0) + gate_vec(p['b_ih_b'], 1)       # (6H,)
    bhh = gate_vec(p['b_hh_f'], 0) + gate_vec(p['b_hh_b'], 1)       # (6H,)
    bih_fold = bih.at[:2 * H2].add(bhh[:2 * H2])   # fold r,z thirds of b_hh (exact)
    bhh_n = bhh[2 * H2:]                           # (2H,) stays inside r*gh_n

    def r8(x):
        return -(-x // 8) * 8

    offs = {}
    offs['wih'] = 0
    offs['whh'] = offs['wih'] + r8(2 * V)
    offs['bih'] = offs['whh'] + r8(H2)
    offs['bhn'] = offs['bih'] + 8
    offs['fcw'] = offs['bhn'] + 8
    offs['fcb'] = offs['fcw'] + r8(H2)
    rows = offs['fcb'] + 8

    slab = jnp.zeros((rows, H6), jnp.float32)
    slab = slab.at[offs['wih']:offs['wih'] + 2 * V, :].set(w_tok_ih)
    slab = slab.at[offs['whh']:offs['whh'] + H2, :].set(whh_blk)
    slab = slab.at[offs['bih'], :].set(bih_fold)
    slab = slab.at[offs['bhn'], :H2].set(bhh_n)
    slab = slab.at[offs['fcw']:offs['fcw'] + H2, :H].set(p['fc_w'].T)
    slab = slab.at[offs['fcb'], :H].set(p['fc_b'])

    return dict(slab=slab, offs=offs, H=H, V=V)


def encoder_rnn_forward(packed, tokens, hidden):
    """tokens: (T, B) int32; hidden: (2, B, H) f32 -> (output (T,B,H), hidden (2,B,H))."""
    T, B = tokens.shape
    H, V = packed['H'], packed['V']

    # Pad batch to a full f32 sublane group; padded rows are independent junk.
    Bp = max(8, -(-B // 8) * 8)
    if Bp != B:
        tokens = jnp.pad(tokens, ((0, 0), (0, Bp - B)))
        hidden = jnp.pad(hidden, ((0, 0), (0, Bp - B), (0, 0)))

    # Column 0: forward-time token ids; column 1: reversed-time token ids.
    tok2 = jnp.stack([tokens.reshape(T * Bp),
                      tokens[::-1].reshape(T * Bp)], axis=1).astype(jnp.int32)
    h0 = jnp.concatenate([hidden[0], hidden[1]], axis=1).astype(jnp.float32)  # (Bp, 2H)

    kernel = functools.partial(encoder_rnn_kernel, H=H, V=V, T=T, Bp=Bp,
                               offs=packed['offs'])
    vmem = pl.BlockSpec(memory_space=pltpu.MemorySpace.VMEM)

    out_flat, h_cat = pl.pallas_call(
        kernel,
        out_shape=(jax.ShapeDtypeStruct((T * Bp, H), jnp.float32),
                   jax.ShapeDtypeStruct((Bp, 2 * H), jnp.float32)),
        in_specs=[vmem, vmem, vmem],
        out_specs=(vmem, vmem),
    )(tok2, h0, packed['slab'])

    out = out_flat.reshape(T, Bp, H)[:, :B, :]
    h_out = jnp.stack([h_cat[:B, :H], h_cat[:B, H:]], axis=0)
    return out, h_out


def reference_forward(params, tokens, hidden):
    """Pure-JAX PyTorch-equivalent reference. tokens (T,B) int32, hidden (2,B,H)."""
    H = params['emb'].shape[1]
    emb = params['emb'][tokens]                                  # (T, B, H)

    def run_dir(h0, w_ih, w_hh, b_ih, b_hh, reverse):
        xs = emb[::-1] if reverse else emb

        def step(h, x):
            gi = x @ w_ih.T + b_ih
            gh = h @ w_hh.T + b_hh
            r = jax.nn.sigmoid(gi[:, :H] + gh[:, :H])
            z = jax.nn.sigmoid(gi[:, H:2 * H] + gh[:, H:2 * H])
            n = jnp.tanh(gi[:, 2 * H:] + r * gh[:, 2 * H:])
            h_new = (1.0 - z) * n + z * h
            return h_new, h_new

        h_last, ys = lax.scan(step, h0, xs)
        if reverse:
            ys = ys[::-1]
        return ys, h_last

    yf, hf = run_dir(hidden[0], params['w_ih_f'], params['w_hh_f'],
                     params['b_ih_f'], params['b_hh_f'], reverse=False)
    yb, hb = run_dir(hidden[1], params['w_ih_b'], params['w_hh_b'],
                     params['b_ih_b'], params['b_hh_b'], reverse=True)
    out = jnp.concatenate([yf, yb], axis=-1) @ params['fc_w'].T + params['fc_b']
    return out, jnp.stack([hf, hb])


if __name__ == "__main__":
    key = jax.random.PRNGKey(0)
    kp, kt, kh = jax.random.split(key, 3)

    params = make_params(kp)
    packed = pack_params(params)   # one-time weight packing (not per-call)

    tokens = jax.random.randint(kt, (SEQ_LEN, BATCH), 0, VOCAB, jnp.int32)   # (T, B)
    hidden = jax.random.normal(kh, (2, BATCH, HIDDEN), jnp.float32)          # (2, B, H)

    out, h_out = encoder_rnn_forward(packed, tokens, hidden)
    jax.block_until_ready((out, h_out))

    ref_out, ref_h = reference_forward(params, tokens, hidden)
    assert jnp.allclose(out, ref_out, atol=5e-5, rtol=5e-5)
    assert jnp.allclose(h_out, ref_h, atol=5e-5, rtol=5e-5)

    print("KERNEL_OK")
</pallas_src>

<mosaic_0001>
module attributes {stable_mosaic.version = 11 : i64} {
  func.func @encoder_rnn_kernel(%arg0: memref<64x2xi32, #tpu.memory_space<vmem>>, %arg1: memref<8x64xf32, #tpu.memory_space<vmem>>, %arg2: memref<184x192xf32, #tpu.memory_space<vmem>>, %arg3: memref<64x32xf32, #tpu.memory_space<vmem>>, %arg4: memref<8x64xf32, #tpu.memory_space<vmem>>) attributes {dimension_semantics = [], scalar_prefetch = 0 : i64, scratch_operands = 0 : i64, tpu.core_type = #tpu.core_type<tc>} {
    %c0 = arith.constant 0 : index
    %c0_0 = arith.constant 0 : index
    %0 = vector.load %arg2[%c0, %c0_0] : memref<184x192xf32, #tpu.memory_space<vmem>>, vector<32x192xf32>
    %c32 = arith.constant 32 : index
    %c0_1 = arith.constant 0 : index
    %1 = vector.load %arg2[%c32, %c0_1] : memref<184x192xf32, #tpu.memory_space<vmem>>, vector<64x192xf32>
    %c96 = arith.constant 96 : index
    %c0_2 = arith.constant 0 : index
    %2 = vector.load %arg2[%c96, %c0_2] : memref<184x192xf32, #tpu.memory_space<vmem>>, vector<1x192xf32>
    %c104 = arith.constant 104 : index
    %c0_3 = arith.constant 0 : index
    %3 = vector.load %arg2[%c104, %c0_3] : memref<184x192xf32, #tpu.memory_space<vmem>>, vector<1x64xf32>
    %4 = vector.shape_cast %3 : vector<1x64xf32> to vector<1x64xf32>
    %5 = vector.broadcast %4 : vector<1x64xf32> to vector<8x64xf32>
    %c112 = arith.constant 112 : index
    %c0_4 = arith.constant 0 : index
    %6 = vector.load %arg2[%c112, %c0_4] : memref<184x192xf32, #tpu.memory_space<vmem>>, vector<64x32xf32>
    %c176 = arith.constant 176 : index
    %c0_5 = arith.constant 0 : index
    %7 = vector.load %arg2[%c176, %c0_5] : memref<184x192xf32, #tpu.memory_space<vmem>>, vector<1x32xf32>
    %c0_6 = arith.constant 0 : index
    %c0_7 = arith.constant 0 : index
    %8 = vector.load %arg0[%c0_6, %c0_7] : memref<64x2xi32, #tpu.memory_space<vmem>>, vector<64x2xi32>
    %9 = tpu.iota {dimensions = array<i32: 1>} : vector<64x32xi32>
    %c16_i32 = arith.constant 16 : i32
    %10 = vector.broadcast %c16_i32 : i32 to vector<64x32xi32>
    %11 = arith.cmpi slt, %9, %10 : vector<64x32xi32>
    %12 = vector.extract_strided_slice %8 {offsets = [0, 0], sizes = [64, 1], strides = [1, 1]} : vector<64x2xi32> to vector<64x1xi32>
    %13 = vector.extract_strided_slice %8 {offsets = [0, 1], sizes = [64, 1], strides = [1, 1]} : vector<64x2xi32> to vector<64x1xi32>
    %c16_i32_8 = arith.constant 16 : i32
    %14 = vector.broadcast %c16_i32_8 : i32 to vector<64x1xi32>
    %15 = arith.addi %13, %14 : vector<64x1xi32>
    %16 = vector.shape_cast %12 : vector<64x1xi32> to vector<64x1xi32>
    %17 = vector.broadcast %16 : vector<64x1xi32> to vector<64x32xi32>
    %18 = vector.shape_cast %15 : vector<64x1xi32> to vector<64x1xi32>
    %19 = vector.broadcast %18 : vector<64x1xi32> to vector<64x32xi32>
    %20 = arith.select %11, %17, %19 : vector<64x32xi1>, vector<64x32xi32>
    %21 = arith.cmpi eq, %9, %20 : vector<64x32xi32>
    %22 = arith.extui %21 : vector<64x32xi1> to vector<64x32xi32>
    %23 = arith.sitofp %22 : vector<64x32xi32> to vector<64x32xf32>
    %cst = arith.constant dense<0.000000e+00> : vector<64x192xf32>
    %24 = tpu.matmul %23, %0, %cst {dimension_numbers = #tpu.dot_dimension_numbers<[1], [0], [0], [1], [0, 0, 1, 1], [], []>} : vector<64x32xf32>, vector<32x192xf32>, vector<64x192xf32> -> vector<64x192xf32>
    %25 = vector.broadcast %2 : vector<1x192xf32> to vector<64x192xf32>
    %26 = arith.addf %24, %25 : vector<64x192xf32>
    %c0_9 = arith.constant 0 : index
    %c0_10 = arith.constant 0 : index
    %27 = vector.load %arg1[%c0_9, %c0_10] : memref<8x64xf32, #tpu.memory_space<vmem>>, vector<8x64xf32>
    %cst_11 = arith.constant dense<0.000000e+00> : vector<8x192xf32>
    %28 = tpu.matmul %27, %1, %cst_11 {dimension_numbers = #tpu.dot_dimension_numbers<[1], [0], [0], [1], [0, 0, 1, 1], [], []>} : vector<8x64xf32>, vector<64x192xf32>, vector<8x192xf32> -> vector<8x192xf32>
    %29 = vector.extract_strided_slice %26 {offsets = [0, 0], sizes = [8, 192], strides = [1, 1]} : vector<64x192xf32> to vector<8x192xf32>
    %30 = vector.extract_strided_slice %29 {offsets = [0, 0], sizes = [8, 64], strides = [1, 1]} : vector<8x192xf32> to vector<8x64xf32>
    %31 = vector.extract_strided_slice %28 {offsets = [0, 0], sizes = [8, 64], strides = [1, 1]} : vector<8x192xf32> to vector<8x64xf32>
    %32 = arith.addf %30, %31 : vector<8x64xf32>
    %33 = arith.negf %32 : vector<8x64xf32>
    %34 = math.exp %33 : vector<8x64xf32>
    %cst_12 = arith.constant 1.000000e+00 : f32
    %35 = vector.broadcast %cst_12 : f32 to vector<8x64xf32>
    %36 = arith.addf %35, %34 : vector<8x64xf32>
    %37 = arith.divf %35, %36 : vector<8x64xf32>
    %38 = vector.extract_strided_slice %29 {offsets = [0, 64], sizes = [8, 64], strides = [1, 1]} : vector<8x192xf32> to vector<8x64xf32>
    %39 = vector.extract_strided_slice %28 {offsets = [0, 64], sizes = [8, 64], strides = [1, 1]} : vector<8x192xf32> to vector<8x64xf32>
    %40 = arith.addf %38, %39 : vector<8x64xf32>
    %41 = arith.negf %40 : vector<8x64xf32>
    %42 = math.exp %41 : vector<8x64xf32>
    %cst_13 = arith.constant 1.000000e+00 : f32
    %43 = vector.broadcast %cst_13 : f32 to vector<8x64xf32>
    %44 = arith.addf %43, %42 : vector<8x64xf32>
    %45 = arith.divf %43, %44 : vector<8x64xf32>
    %46 = vector.extract_strided_slice %29 {offsets = [0, 128], sizes = [8, 64], strides = [1, 1]} : vector<8x192xf32> to vector<8x64xf32>
    %47 = vector.extract_strided_slice %28 {offsets = [0, 128], sizes = [8, 64], strides = [1, 1]} : vector<8x192xf32> to vector<8x64xf32>
    %48 = arith.addf %47, %5 : vector<8x64xf32>
    %49 = arith.mulf %37, %48 : vector<8x64xf32>
    %50 = arith.addf %46, %49 : vector<8x64xf32>
    %51 = math.tanh %50 : vector<8x64xf32>
    %cst_14 = arith.constant 1.000000e+00 : f32
    %52 = vector.broadcast %cst_14 : f32 to vector<8x64xf32>
    %53 = arith.subf %52, %45 : vector<8x64xf32>
    %54 = arith.mulf %53, %51 : vector<8x64xf32>
    %55 = arith.mulf %45, %27 : vector<8x64xf32>
    %56 = arith.addf %54, %55 : vector<8x64xf32>
    %cst_15 = arith.constant dense<0.000000e+00> : vector<8x192xf32>
    %57 = tpu.matmul %56, %1, %cst_15 {dimension_numbers = #tpu.dot_dimension_numbers<[1], [0], [0], [1], [0, 0, 1, 1], [], []>} : vector<8x64xf32>, vector<64x192xf32>, vector<8x192xf32> -> vector<8x192xf32>
    %58 = vector.extract_strided_slice %26 {offsets = [8, 0], sizes = [8, 192], strides = [1, 1]} : vector<64x192xf32> to vector<8x192xf32>
    %59 = vector.extract_strided_slice %58 {offsets = [0, 0], sizes = [8, 64], strides = [1, 1]} : vector<8x192xf32> to vector<8x64xf32>
    %60 = vector.extract_strided_slice %57 {offsets = [0, 0], sizes = [8, 64], strides = [1, 1]} : vector<8x192xf32> to vector<8x64xf32>
    %61 = arith.addf %59, %60 : vector<8x64xf32>
    %62 = arith.negf %61 : vector<8x64xf32>
    %63 = math.exp %62 : vector<8x64xf32>
    %cst_16 = arith.constant 1.000000e+00 : f32
    %64 = vector.broadcast %cst_16 : f32 to vector<8x64xf32>
    %65 = arith.addf %64, %63 : vector<8x64xf32>
    %66 = arith.divf %64, %65 : vector<8x64xf32>
    %67 = vector.extract_strided_slice %58 {offsets = [0, 64], sizes = [8, 64], strides = [1, 1]} : vector<8x192xf32> to vector<8x64xf32>
    %68 = vector.extract_strided_slice %57 {offsets = [0, 64], sizes = [8, 64], strides = [1, 1]} : vector<8x192xf32> to vector<8x64xf32>
    %69 = arith.addf %67, %68 : vector<8x64xf32>
    %70 = arith.negf %69 : vector<8x64xf32>
    %71 = math.exp %70 : vector<8x64xf32>
    %cst_17 = arith.constant 1.000000e+00 : f32
    %72 = vector.broadcast %cst_17 : f32 to vector<8x64xf32>
    %73 = arith.addf %72, %71 : vector<8x64xf32>
    %74 = arith.divf %72, %73 : vector<8x64xf32>
    %75 = vector.extract_strided_slice %58 {offsets = [0, 128], sizes = [8, 64], strides = [1, 1]} : vector<8x192xf32> to vector<8x64xf32>
    %76 = vector.extract_strided_slice %57 {offsets = [0, 128], sizes = [8, 64], strides = [1, 1]} : vector<8x192xf32> to vector<8x64xf32>
    %77 = arith.addf %76, %5 : vector<8x64xf32>
    %78 = arith.mulf %66, %77 : vector<8x64xf32>
    %79 = arith.addf %75, %78 : vector<8x64xf32>
    %80 = math.tanh %79 : vector<8x64xf32>
    %cst_18 = arith.constant 1.000000e+00 : f32
    %81 = vector.broadcast %cst_18 : f32 to vector<8x64xf32>
    %82 = arith.subf %81, %74 : vector<8x64xf32>
    %83 = arith.mulf %82, %80 : vector<8x64xf32>
    %84 = arith.mulf %74, %56 : vector<8x64xf32>
    %85 = arith.addf %83, %84 : vector<8x64xf32>
    %cst_19 = arith.constant dense<0.000000e+00> : vector<8x192xf32>
    %86 = tpu.matmul %85, %1, %cst_19 {dimension_numbers = #tpu.dot_dimension_numbers<[1], [0], [0], [1], [0, 0, 1, 1], [], []>} : vector<8x64xf32>, vector<64x192xf32>, vector<8x192xf32> -> vector<8x192xf32>
    %87 = vector.extract_strided_slice %26 {offsets = [16, 0], sizes = [8, 192], strides = [1, 1]} : vector<64x192xf32> to vector<8x192xf32>
    %88 = vector.extract_strided_slice %87 {offsets = [0, 0], sizes = [8, 64], strides = [1, 1]} : vector<8x192xf32> to vector<8x64xf32>
    %89 = vector.extract_strided_slice %86 {offsets = [0, 0], sizes = [8, 64], strides = [1, 1]} : vector<8x192xf32> to vector<8x64xf32>
    %90 = arith.addf %88, %89 : vector<8x64xf32>
    %91 = arith.negf %90 : vector<8x64xf32>
    %92 = math.exp %91 : vector<8x64xf32>
    %cst_20 = arith.constant 1.000000e+00 : f32
    %93 = vector.broadcast %cst_20 : f32 to vector<8x64xf32>
    %94 = arith.addf %93, %92 : vector<8x64xf32>
    %95 = arith.divf %93, %94 : vector<8x64xf32>
    %96 = vector.extract_strided_slice %87 {offsets = [0, 64], sizes = [8, 64], strides = [1, 1]} : vector<8x192xf32> to vector<8x64xf32>
    %97 = vector.extract_strided_slice %86 {offsets = [0, 64], sizes = [8, 64], strides = [1, 1]} : vector<8x192xf32> to vector<8x64xf32>
    %98 = arith.addf %96, %97 : vector<8x64xf32>
    %99 = arith.negf %98 : vector<8x64xf32>
    %100 = math.exp %99 : vector<8x64xf32>
    %cst_21 = arith.constant 1.000000e+00 : f32
    %101 = vector.broadcast %cst_21 : f32 to vector<8x64xf32>
    %102 = arith.addf %101, %100 : vector<8x64xf32>
    %103 = arith.divf %101, %102 : vector<8x64xf32>
    %104 = vector.extract_strided_slice %87 {offsets = [0, 128], sizes = [8, 64], strides = [1, 1]} : vector<8x192xf32> to vector<8x64xf32>
    %105 = vector.extract_strided_slice %86 {offsets = [0, 128], sizes = [8, 64], strides = [1, 1]} : vector<8x192xf32> to vector<8x64xf32>
    %106 = arith.addf %105, %5 : vector<8x64xf32>
    %107 = arith.mulf %95, %106 : vector<8x64xf32>
    %108 = arith.addf %104, %107 : vector<8x64xf32>
    %109 = math.tanh %108 : vector<8x64xf32>
    %cst_22 = arith.constant 1.000000e+00 : f32
    %110 = vector.broadcast %cst_22 : f32 to vector<8x64xf32>
    %111 = arith.subf %110, %103 : vector<8x64xf32>
    %112 = arith.mulf %111, %109 : vector<8x64xf32>
    %113 = arith.mulf %103, %85 : vector<8x64xf32>
    %114 = arith.addf %112, %113 : vector<8x64xf32>
    %cst_23 = arith.constant dense<0.000000e+00> : vector<8x192xf32>
    %115 = tpu.matmul %114, %1, %cst_23 {dimension_numbers = #tpu.dot_dimension_numbers<[1], [0], [0], [1], [0, 0, 1, 1], [], []>} : vector<8x64xf32>, vector<64x192xf32>, vector<8x192xf32> -> vector<8x192xf32>
    %116 = vector.extract_strided_slice %26 {offsets = [24, 0], sizes = [8, 192], strides = [1, 1]} : vector<64x192xf32> to vector<8x192xf32>
    %117 = vector.extract_strided_slice %116 {offsets = [0, 0], sizes = [8, 64], strides = [1, 1]} : vector<8x192xf32> to vector<8x64xf32>
    %118 = vector.extract_strided_slice %115 {offsets = [0, 0], sizes = [8, 64], strides = [1, 1]} : vector<8x192xf32> to vector<8x64xf32>
    %119 = arith.addf %117, %118 : vector<8x64xf32>
    %120 = arith.negf %119 : vector<8x64xf32>
    %121 = math.exp %120 : vector<8x64xf32>
    %cst_24 = arith.constant 1.000000e+00 : f32
    %122 = vector.broadcast %cst_24 : f32 to vector<8x64xf32>
    %123 = arith.addf %122, %121 : vector<8x64xf32>
    %124 = arith.divf %122, %123 : vector<8x64xf32>
    %125 = vector.extract_strided_slice %116 {offsets = [0, 64], sizes = [8, 64], strides = [1, 1]} : vector<8x192xf32> to vector<8x64xf32>
    %126 = vector.extract_strided_slice %115 {offsets = [0, 64], sizes = [8, 64], strides = [1, 1]} : vector<8x192xf32> to vector<8x64xf32>
    %127 = arith.addf %125, %126 : vector<8x64xf32>
    %128 = arith.negf %127 : vector<8x64xf32>
    %129 = math.exp %128 : vector<8x64xf32>
    %cst_25 = arith.constant 1.000000e+00 : f32
    %130 = vector.broadcast %cst_25 : f32 to vector<8x64xf32>
    %131 = arith.addf %130, %129 : vector<8x64xf32>
    %132 = arith.divf %130, %131 : vector<8x64xf32>
    %133 = vector.extract_strided_slice %116 {offsets = [0, 128], sizes = [8, 64], strides = [1, 1]} : vector<8x192xf32> to vector<8x64xf32>
    %134 = vector.extract_strided_slice %115 {offsets = [0, 128], sizes = [8, 64], strides = [1, 1]} : vector<8x192xf32> to vector<8x64xf32>
    %135 = arith.addf %134, %5 : vector<8x64xf32>
    %136 = arith.mulf %124, %135 : vector<8x64xf32>
    %137 = arith.addf %133, %136 : vector<8x64xf32>
    %138 = math.tanh %137 : vector<8x64xf32>
    %cst_26 = arith.constant 1.000000e+00 : f32
    %139 = vector.broadcast %cst_26 : f32 to vector<8x64xf32>
    %140 = arith.subf %139, %132 : vector<8x64xf32>
    %141 = arith.mulf %140, %138 : vector<8x64xf32>
    %142 = arith.mulf %132, %114 : vector<8x64xf32>
    %143 = arith.addf %141, %142 : vector<8x64xf32>
    %cst_27 = arith.constant dense<0.000000e+00> : vector<8x192xf32>
    %144 = tpu.matmul %143, %1, %cst_27 {dimension_numbers = #tpu.dot_dimension_numbers<[1], [0], [0], [1], [0, 0, 1, 1], [], []>} : vector<8x64xf32>, vector<64x192xf32>, vector<8x192xf32> -> vector<8x192xf32>
    %145 = vector.extract_strided_slice %26 {offsets = [32, 0], sizes = [8, 192], strides = [1, 1]} : vector<64x192xf32> to vector<8x192xf32>
    %146 = vector.extract_strided_slice %145 {offsets = [0, 0], sizes = [8, 64], strides = [1, 1]} : vector<8x192xf32> to vector<8x64xf32>
    %147 = vector.extract_strided_slice %144 {offsets = [0, 0], sizes = [8, 64], strides = [1, 1]} : vector<8x192xf32> to vector<8x64xf32>
    %148 = arith.addf %146, %147 : vector<8x64xf32>
    %149 = arith.negf %148 : vector<8x64xf32>
    %150 = math.exp %149 : vector<8x64xf32>
    %cst_28 = arith.constant 1.000000e+00 : f32
    %151 = vector.broadcast %cst_28 : f32 to vector<8x64xf32>
    %152 = arith.addf %151, %150 : vector<8x64xf32>
    %153 = arith.divf %151, %152 : vector<8x64xf32>
    %154 = vector.extract_strided_slice %145 {offsets = [0, 64], sizes = [8, 64], strides = [1, 1]} : vector<8x192xf32> to vector<8x64xf32>
    %155 = vector.extract_strided_slice %144 {offsets = [0, 64], sizes = [8, 64], strides = [1, 1]} : vector<8x192xf32> to vector<8x64xf32>
    %156 = arith.addf %154, %155 : vector<8x64xf32>
    %157 = arith.negf %156 : vector<8x64xf32>
    %158 = math.exp %157 : vector<8x64xf32>
    %cst_29 = arith.constant 1.000000e+00 : f32
    %159 = vector.broadcast %cst_29 : f32 to vector<8x64xf32>
    %160 = arith.addf %159, %158 : vector<8x64xf32>
    %161 = arith.divf %159, %160 : vector<8x64xf32>
    %162 = vector.extract_strided_slice %145 {offsets = [0, 128], sizes = [8, 64], strides = [1, 1]} : vector<8x192xf32> to vector<8x64xf32>
    %163 = vector.extract_strided_slice %144 {offsets = [0, 128], sizes = [8, 64], strides = [1, 1]} : vector<8x192xf32> to vector<8x64xf32>
    %164 = arith.addf %163, %5 : vector<8x64xf32>
    %165 = arith.mulf %153, %164 : vector<8x64xf32>
    %166 = arith.addf %162, %165 : vector<8x64xf32>
    %167 = math.tanh %166 : vector<8x64xf32>
    %cst_30 = arith.constant 1.000000e+00 : f32
    %168 = vector.broadcast %cst_30 : f32 to vector<8x64xf32>
    %169 = arith.subf %168, %161 : vector<8x64xf32>
    %170 = arith.mulf %169, %167 : vector<8x64xf32>
    %171 = arith.mulf %161, %143 : vector<8x64xf32>
    %172 = arith.addf %170, %171 : vector<8x64xf32>
    %cst_31 = arith.constant dense<0.000000e+00> : vector<8x192xf32>
    %173 = tpu.matmul %172, %1, %cst_31 {dimension_numbers = #tpu.dot_dimension_numbers<[1], [0], [0], [1], [0, 0, 1, 1], [], []>} : vector<8x64xf32>, vector<64x192xf32>, vector<8x192xf32> -> vector<8x192xf32>
    %174 = vector.extract_strided_slice %26 {offsets = [40, 0], sizes = [8, 192], strides = [1, 1]} : vector<64x192xf32> to vector<8x192xf32>
    %175 = vector.extract_strided_slice %174 {offsets = [0, 0], sizes = [8, 64], strides = [1, 1]} : vector<8x192xf32> to vector<8x64xf32>
    %176 = vector.extract_strided_slice %173 {offsets = [0, 0], sizes = [8, 64], strides = [1, 1]} : vector<8x192xf32> to vector<8x64xf32>
    %177 = arith.addf %175, %176 : vector<8x64xf32>
    %178 = arith.negf %177 : vector<8x64xf32>
    %179 = math.exp %178 : vector<8x64xf32>
    %cst_32 = arith.constant 1.000000e+00 : f32
    %180 = vector.broadcast %cst_32 : f32 to vector<8x64xf32>
    %181 = arith.addf %180, %179 : vector<8x64xf32>
    %182 = arith.divf %180, %181 : vector<8x64xf32>
    %183 = vector.extract_strided_slice %174 {offsets = [0, 64], sizes = [8, 64], strides = [1, 1]} : vector<8x192xf32> to vector<8x64xf32>
    %184 = vector.extract_strided_slice %173 {offsets = [0, 64], sizes = [8, 64], strides = [1, 1]} : vector<8x192xf32> to vector<8x64xf32>
    %185 = arith.addf %183, %184 : vector<8x64xf32>
    %186 = arith.negf %185 : vector<8x64xf32>
    %187 = math.exp %186 : vector<8x64xf32>
    %cst_33 = arith.constant 1.000000e+00 : f32
    %188 = vector.broadcast %cst_33 : f32 to vector<8x64xf32>
    %189 = arith.addf %188, %187 : vector<8x64xf32>
    %190 = arith.divf %188, %189 : vector<8x64xf32>
    %191 = vector.extract_strided_slice %174 {offsets = [0, 128], sizes = [8, 64], strides = [1, 1]} : vector<8x192xf32> to vector<8x64xf32>
    %192 = vector.extract_strided_slice %173 {offsets = [0, 128], sizes = [8, 64], strides = [1, 1]} : vector<8x192xf32> to vector<8x64xf32>
    %193 = arith.addf %192, %5 : vector<8x64xf32>
    %194 = arith.mulf %182, %193 : vector<8x64xf32>
    %195 = arith.addf %191, %194 : vector<8x64xf32>
    %196 = math.tanh %195 : vector<8x64xf32>
    %cst_34 = arith.constant 1.000000e+00 : f32
    %197 = vector.broadcast %cst_34 : f32 to vector<8x64xf32>
    %198 = arith.subf %197, %190 : vector<8x64xf32>
    %199 = arith.mulf %198, %196 : vector<8x64xf32>
    %200 = arith.mulf %190, %172 : vector<8x64xf32>
    %201 = arith.addf %199, %200 : vector<8x64xf32>
    %cst_35 = arith.constant dense<0.000000e+00> : vector<8x192xf32>
    %202 = tpu.matmul %201, %1, %cst_35 {dimension_numbers = #tpu.dot_dimension_numbers<[1], [0], [0], [1], [0, 0, 1, 1], [], []>} : vector<8x64xf32>, vector<64x192xf32>, vector<8x192xf32> -> vector<8x192xf32>
    %203 = vector.extract_strided_slice %26 {offsets = [48, 0], sizes = [8, 192], strides = [1, 1]} : vector<64x192xf32> to vector<8x192xf32>
    %204 = vector.extract_strided_slice %203 {offsets = [0, 0], sizes = [8, 64], strides = [1, 1]} : vector<8x192xf32> to vector<8x64xf32>
    %205 = vector.extract_strided_slice %202 {offsets = [0, 0], sizes = [8, 64], strides = [1, 1]} : vector<8x192xf32> to vector<8x64xf32>
    %206 = arith.addf %204, %205 : vector<8x64xf32>
    %207 = arith.negf %206 : vector<8x64xf32>
    %208 = math.exp %207 : vector<8x64xf32>
    %cst_36 = arith.constant 1.000000e+00 : f32
    %209 = vector.broadcast %cst_36 : f32 to vector<8x64xf32>
    %210 = arith.addf %209, %208 : vector<8x64xf32>
    %211 = arith.divf %209, %210 : vector<8x64xf32>
    %212 = vector.extract_strided_slice %203 {offsets = [0, 64], sizes = [8, 64], strides = [1, 1]} : vector<8x192xf32> to vector<8x64xf32>
    %213 = vector.extract_strided_slice %202 {offsets = [0, 64], sizes = [8, 64], strides = [1, 1]} : vector<8x192xf32> to vector<8x64xf32>
    %214 = arith.addf %212, %213 : vector<8x64xf32>
    %215 = arith.negf %214 : vector<8x64xf32>
    %216 = math.exp %215 : vector<8x64xf32>
    %cst_37 = arith.constant 1.000000e+00 : f32
    %217 = vector.broadcast %cst_37 : f32 to vector<8x64xf32>
    %218 = arith.addf %217, %216 : vector<8x64xf32>
    %219 = arith.divf %217, %218 : vector<8x64xf32>
    %220 = vector.extract_strided_slice %203 {offsets = [0, 128], sizes = [8, 64], strides = [1, 1]} : vector<8x192xf32> to vector<8x64xf32>
    %221 = vector.extract_strided_slice %202 {offsets = [0, 128], sizes = [8, 64], strides = [1, 1]} : vector<8x192xf32> to vector<8x64xf32>
    %222 = arith.addf %221, %5 : vector<8x64xf32>
    %223 = arith.mulf %211, %222 : vector<8x64xf32>
    %224 = arith.addf %220, %223 : vector<8x64xf32>
    %225 = math.tanh %224 : vector<8x64xf32>
    %cst_38 = arith.constant 1.000000e+00 : f32
    %226 = vector.broadcast %cst_38 : f32 to vector<8x64xf32>
    %227 = arith.subf %226, %219 : vector<8x64xf32>
    %228 = arith.mulf %227, %225 : vector<8x64xf32>
    %229 = arith.mulf %219, %201 : vector<8x64xf32>
    %230 = arith.addf %228, %229 : vector<8x64xf32>
    %cst_39 = arith.constant dense<0.000000e+00> : vector<8x192xf32>
    %231 = tpu.matmul %230, %1, %cst_39 {dimension_numbers = #tpu.dot_dimension_numbers<[1], [0], [0], [1], [0, 0, 1, 1], [], []>} : vector<8x64xf32>, vector<64x192xf32>, vector<8x192xf32> -> vector<8x192xf32>
    %232 = vector.extract_strided_slice %26 {offsets = [56, 0], sizes = [8, 192], strides = [1, 1]} : vector<64x192xf32> to vector<8x192xf32>
    %233 = vector.extract_strided_slice %232 {offsets = [0, 0], sizes = [8, 64], strides = [1, 1]} : vector<8x192xf32> to vector<8x64xf32>
    %234 = vector.extract_strided_slice %231 {offsets = [0, 0], sizes = [8, 64], strides = [1, 1]} : vector<8x192xf32> to vector<8x64xf32>
    %235 = arith.addf %233, %234 : vector<8x64xf32>
    %236 = arith.negf %235 : vector<8x64xf32>
    %237 = math.exp %236 : vector<8x64xf32>
    %cst_40 = arith.constant 1.000000e+00 : f32
    %238 = vector.broadcast %cst_40 : f32 to vector<8x64xf32>
    %239 = arith.addf %238, %237 : vector<8x64xf32>
    %240 = arith.divf %238, %239 : vector<8x64xf32>
    %241 = vector.extract_strided_slice %232 {offsets = [0, 64], sizes = [8, 64], strides = [1, 1]} : vector<8x192xf32> to vector<8x64xf32>
    %242 = vector.extract_strided_slice %231 {offsets = [0, 64], sizes = [8, 64], strides = [1, 1]} : vector<8x192xf32> to vector<8x64xf32>
    %243 = arith.addf %241, %242 : vector<8x64xf32>
    %244 = arith.negf %243 : vector<8x64xf32>
    %245 = math.exp %244 : vector<8x64xf32>
    %cst_41 = arith.constant 1.000000e+00 : f32
    %246 = vector.broadcast %cst_41 : f32 to vector<8x64xf32>
    %247 = arith.addf %246, %245 : vector<8x64xf32>
    %248 = arith.divf %246, %247 : vector<8x64xf32>
    %249 = vector.extract_strided_slice %232 {offsets = [0, 128], sizes = [8, 64], strides = [1, 1]} : vector<8x192xf32> to vector<8x64xf32>
    %250 = vector.extract_strided_slice %231 {offsets = [0, 128], sizes = [8, 64], strides = [1, 1]} : vector<8x192xf32> to vector<8x64xf32>
    %251 = arith.addf %250, %5 : vector<8x64xf32>
    %252 = arith.mulf %240, %251 : vector<8x64xf32>
    %253 = arith.addf %249, %252 : vector<8x64xf32>
    %254 = math.tanh %253 : vector<8x64xf32>
    %cst_42 = arith.constant 1.000000e+00 : f32
    %255 = vector.broadcast %cst_42 : f32 to vector<8x64xf32>
    %256 = arith.subf %255, %248 : vector<8x64xf32>
    %257 = arith.mulf %256, %254 : vector<8x64xf32>
    %258 = arith.mulf %248, %230 : vector<8x64xf32>
    %259 = arith.addf %257, %258 : vector<8x64xf32>
    %260 = tpu.iota {dimensions = array<i32: 1>} : vector<8x64xi32>
    %c32_i32 = arith.constant 32 : i32
    %261 = vector.broadcast %c32_i32 : i32 to vector<8x64xi32>
    %262 = arith.cmpi slt, %260, %261 : vector<8x64xi32>
    %263 = arith.select %262, %56, %259 : vector<8x64xi1>, vector<8x64xf32>
    %264 = arith.select %262, %85, %230 : vector<8x64xi1>, vector<8x64xf32>
    %265 = arith.select %262, %114, %201 : vector<8x64xi1>, vector<8x64xf32>
    %266 = arith.select %262, %143, %172 : vector<8x64xi1>, vector<8x64xf32>
    %267 = arith.select %262, %172, %143 : vector<8x64xi1>, vector<8x64xf32>
    %268 = arith.select %262, %201, %114 : vector<8x64xi1>, vector<8x64xf32>
    %269 = arith.select %262, %230, %85 : vector<8x64xi1>, vector<8x64xf32>
    %270 = arith.select %262, %259, %56 : vector<8x64xi1>, vector<8x64xf32>
    %271 = tpu.concatenate %263, %264, %265, %266, %267, %268, %269, %270 in 0 : vector<8x64xf32>, vector<8x64xf32>, vector<8x64xf32>, vector<8x64xf32>, vector<8x64xf32>, vector<8x64xf32>, vector<8x64xf32>, vector<8x64xf32> -> vector<64x64xf32>
    %cst_43 = arith.constant dense<0.000000e+00> : vector<64x32xf32>
    %272 = tpu.matmul %271, %6, %cst_43 {dimension_numbers = #tpu.dot_dimension_numbers<[1], [0], [0], [1], [0, 0, 1, 1], [], []>} : vector<64x64xf32>, vector<64x32xf32>, vector<64x32xf32> -> vector<64x32xf32>
    %273 = vector.broadcast %7 : vector<1x32xf32> to vector<64x32xf32>
    %274 = arith.addf %272, %273 : vector<64x32xf32>
    %c0_44 = arith.constant 0 : index
    %c0_45 = arith.constant 0 : index
    %275 = vector.load %arg3[%c0_44, %c0_45] : memref<64x32xf32, #tpu.memory_space<vmem>>, vector<64x32xf32>
    tpu.vector_store %arg3[%c0_44, %c0_45], %274 {strides = array<i32>} : memref<64x32xf32, #tpu.memory_space<vmem>>, vector<64x32xf32>,
    %c0_46 = arith.constant 0 : index
    %c0_47 = arith.constant 0 : index
    %276 = vector.load %arg4[%c0_46, %c0_47] : memref<8x64xf32, #tpu.memory_space<vmem>>, vector<8x64xf32>
    tpu.vector_store %arg4[%c0_46, %c0_47], %259 {strides = array<i32>} : memref<8x64xf32, #tpu.memory_space<vmem>>, vector<8x64xf32>,
    return
  }
}

</mosaic_0001>

<llo_original>
// kernel: tpu_custom_call.1
$region0: #{tpu_custom_call.1}
  #allocation0 [shape = 'u32[]', space=smem, size = 0x4, offset = 0x4, fixed_abs, tag = 'smem constant byte address 0x4 - core index']
  #allocation1 [shape = 'u32[144,128]{1,0:T(1,128)}', space=vmem, size = 0x12000, scoped, tag = 'internal scratch']
  %s0 = inlined_call_operand.vmem [shape: s32[64,2], index: 0, kind: input, shape index: {}]
  %s1 = inlined_call_operand.vmem [shape: f32[8,64], index: 1, kind: input, shape index: {}]
  %s2 = inlined_call_operand.hbm [shape: f32[184,192], index: 2, kind: input, shape index: {}]
  %s3 = inlined_call_operand.vmem [shape: f32[64,32], index: 3, kind: output, shape index: {0}]
  %s4 = inlined_call_operand.hbm [shape: f32[8,64], index: 4, kind: output, shape index: {1}]
  %5 = xla_tuple %s3, %s4
  %s6 = sld [smem:[#allocation0]]
  $region34: #{tpu_custom_call.1} parent=0
    _
  %s8 = ssub.s32 1, %s6
  %s9 = scalar_select 0, %s8, %s6
  $region1: #{tpu_custom_call.1} parent=0
    #allocation2 [shape = 'u8[188416]{0}', space=vmem, size = 0x2e000, scoped, tag = 'input window, operand 2, single buffered']
    #allocation3 [shape = 's32[1]{0}', space=sflag, size = 0x4, scoped, tag = 'scoped memory for tpu_custom_call.1']
    #allocation4 [shape = 's32[1]{0}', space=sflag, size = 0x4, scoped, tag = 'scoped memory for tpu_custom_call.1']
    #allocation5 [shape = 'u8[4096]{0}', space=vmem, size = 0x1000, scoped, tag = 'output window, operand 1, single buffered']
    %10 = vsyncpa [#allocation3], 0
    %11 = vsyncpa [#allocation4], 0
    // Predicated region
    $region2: #{tpu_custom_call.1} parent=1 // pred_check
      _
    $region3: #{tpu_custom_call.1} parent=1 // pred_check_branch
      %13 = sbr.rel (0) target = $region5
    $region4: #{tpu_custom_call.1} parent=1 // pred_region
      _
    $region5: #{tpu_custom_call.1} parent=1 // pred_fallthru
      _
    // Predicated region
    $region6: #{tpu_custom_call.1} parent=1 // pred_check
      _
    $region7: #{tpu_custom_call.1} parent=1 // pred_check_branch
      %15 = sbr.rel (0) target = $region9
    $region8: #{tpu_custom_call.1} parent=1 // pred_region
      _
    $region9: #{tpu_custom_call.1} parent=1 // pred_fallthru
      _
    // Predicated region
    $region10: #{tpu_custom_call.1} parent=1 // pred_check
      _
    $region11: #{tpu_custom_call.1} parent=1 // pred_check_branch
      %17 = sbr.rel (0) target = $region13
    $region12: #{tpu_custom_call.1} parent=1 // pred_region
      %s19 = ssub.s32 5888, 5888
      %20 = vsyncadd [#allocation3], %s19
      %s21 = sshll.u32 [#allocation2], 4
      %s22 = int_to_ptr.vmem [resolvable:$true] %s21
      %27 = dma.hbm_to_vmem [thread:$0]  %s2, 5888, %s22, [#allocation3], 256, 256, 16
    $region13: #{tpu_custom_call.1} parent=1 // pred_fallthru
      _
    // Predicated region
    $region14: #{tpu_custom_call.1} parent=1 // pred_check
      _
    $region15: #{tpu_custom_call.1} parent=1 // pred_check_branch
      %29 = sbr.rel (0) target = $region17
    $region16: #{tpu_custom_call.1} parent=1 // pred_region
      %30 = dma.done [#allocation3], 5888
    $region17: #{tpu_custom_call.1} parent=1 // pred_fallthru
      _
    %v31 = vld [vmem:[#allocation2] sm:$0xff]
    %v32 = vld [vmem:[#allocation2 + $0x8] sm:$0xff]
    %v33 = vld [vmem:[#allocation2 + $0x10] sm:$0xff]
    %v34 = vld [vmem:[#allocation2 + $0x18] sm:$0xff]
    %v35 = vld [vmem:[#allocation2 + $0x20] sm:$0xff]
    %v36 = vld [vmem:[#allocation2 + $0x28] sm:$0xff]
    %v37 = vld [vmem:[#allocation2 + $0x30] sm:$0xff]
    %v38 = vld [vmem:[#allocation2 + $0x38] sm:$0xff]
    %v39 = vld [vmem:[#allocation2 + $0x40] sm:$0xff]
    %v40 = vld [vmem:[#allocation2 + $0x48] sm:$0xff]
    %v41 = vld [vmem:[#allocation2 + $0x50] sm:$0xff]
    %v42 = vld [vmem:[#allocation2 + $0x58] sm:$0xff]
    %v43 = vld [vmem:[#allocation2 + $0x60] sm:$0xff]
    %v44 = vld [vmem:[#allocation2 + $0x68] sm:$0xff]
    %v45 = vld [vmem:[#allocation2 + $0x70] sm:$0xff]
    %v46 = vld [vmem:[#allocation2 + $0x78] sm:$0xff]
    %v47 = vld [vmem:[#allocation2 + $0x80] sm:$0xff]
    %v48 = vld [vmem:[#allocation2 + $0x88] sm:$0xff]
    %v49 = vld [vmem:[#allocation2 + $0x90] sm:$0xff]
    %v50 = vld [vmem:[#allocation2 + $0x98] sm:$0xff]
    %v51 = vld [vmem:[#allocation2 + $0xa0] sm:$0xff]
    %v52 = vld [vmem:[#allocation2 + $0xa8] sm:$0xff]
    %v53 = vld [vmem:[#allocation2 + $0xb0] sm:$0xff]
    %v54 = vld [vmem:[#allocation2 + $0xb8] sm:$0xff]
    %s55 = scalar_lea.vmem [#allocation2], 192
    %v56 = vld [vmem:[%s55] ss:$8 sm:$0x3]
    %v57 = vld [vmem:[#allocation2 + $0xd0] ss:$0 sm:$0xff]
    %v58 = vld [vmem:[#allocation2 + $0xe0] sm:$0xff]
    %v59 = vld [vmem:[#allocation2 + $0xf0] sm:$0xff]
    %v60 = vld [vmem:[#allocation2 + $0x100] sm:$0xff]
    %v61 = vld [vmem:[#allocation2 + $0x110] sm:$0xff]
    %v62 = vld [vmem:[#allocation2 + $0x120] sm:$0xff]
    %v63 = vld [vmem:[#allocation2 + $0x130] sm:$0xff]
    %v64 = vld [vmem:[#allocation2 + $0x140] sm:$0xff]
    %v65 = vld [vmem:[#allocation2 + $0x150] sm:$0xff]
    %v66 = vld [vmem:[#allocation2 + $0x160] ss:$0 sm:$0xff]
    %v67 = vld [vmem:[%s0] sm:$0xff]
    %v68 = vld [vmem:[%s0 + $0x8] sm:$0xff]
    %v69 = vld [vmem:[%s0 + $0x10] sm:$0xff]
    %v70 = vld [vmem:[%s0 + $0x18] sm:$0xff]
    %v71 = vld [vmem:[%s0 + $0x20] sm:$0xff]
    %v72 = vld [vmem:[%s0 + $0x28] sm:$0xff]
    %v73 = vld [vmem:[%s0 + $0x30] sm:$0xff]
    %v74 = vld [vmem:[%s0 + $0x38] sm:$0xff]
    %v75 = vlaneseq
    %v76 = vand.u32 %v75, 127
    %vm77 = vcmp.lt.s32.totalorder %v76, 16
    %v78 = vadd.s32 %v67, 16
    %v79 = vadd.s32 %v68, 16
    %v80 = vadd.s32 %v69, 16
    %v81 = vadd.s32 %v70, 16
    %v82 = vadd.s32 %v71, 16
    %v83 = vadd.s32 %v72, 16
    %v84 = vadd.s32 %v73, 16
    %v85 = vadd.s32 %v74, 16
    %86 = vset.pattern.permute.xlu0 0
    %87 = vperm.xlu0 %86, %v67
    %v88 = vpop.permute.xlu0 %87
    %89 = vset.pattern.permute.xlu0 0
    %90 = vperm.xlu0 %89, %v68
    %v91 = vpop.permute.xlu0 %90
    %92 = vset.pattern.permute.xlu0 0
    %93 = vperm.xlu0 %92, %v69
    %v94 = vpop.permute.xlu0 %93
    %95 = vset.pattern.permute.xlu0 0
    %96 = vperm.xlu0 %95, %v70
    %v97 = vpop.permute.xlu0 %96
    %98 = vset.pattern.permute.xlu0 0
    %99 = vperm.xlu0 %98, %v71
    %v100 = vpop.permute.xlu0 %99
    %101 = vset.pattern.permute.xlu0 0
    %102 = vperm.xlu0 %101, %v72
    %v103 = vpop.permute.xlu0 %102
    %104 = vset.pattern.permute.xlu0 0
    %105 = vperm.xlu0 %104, %v73
    %v106 = vpop.permute.xlu0 %105
    %107 = vset.pattern.permute.xlu0 0
    %108 = vperm.xlu0 %107, %v74
    %v109 = vpop.permute.xlu0 %108
    %110 = vset.pattern.permute.xlu0 1
    %111 = vperm.xlu0 %110, %v78
    %v112 = vpop.permute.xlu0 %111
    %113 = vset.pattern.permute.xlu0 1
    %114 = vperm.xlu0 %113, %v79
    %v115 = vpop.permute.xlu0 %114
    %116 = vset.pattern.permute.xlu0 1
    %117 = vperm.xlu0 %116, %v80
    %v118 = vpop.permute.xlu0 %117
    %119 = vset.pattern.permute.xlu0 1
    %120 = vperm.xlu0 %119, %v81
    %v121 = vpop.permute.xlu0 %120
    %122 = vset.pattern.permute.xlu0 1
    %123 = vperm.xlu0 %122, %v82
    %v124 = vpop.permute.xlu0 %123
    %125 = vset.pattern.permute.xlu0 1
    %126 = vperm.xlu0 %125, %v83
    %v127 = vpop.permute.xlu0 %126
    %128 = vset.pattern.permute.xlu0 1
    %129 = vperm.xlu0 %128, %v84
    %v130 = vpop.permute.xlu0 %129
    %131 = vset.pattern.permute.xlu0 1
    %132 = vperm.xlu0 %131, %v85
    %v133 = vpop.permute.xlu0 %132
    %v134 = vsel %vm77, %v88, %v112
    %v135 = vsel %vm77, %v91, %v115
    %v136 = vsel %vm77, %v94, %v118
    %v137 = vsel %vm77, %v97, %v121
    %v138 = vsel %vm77, %v100, %v124
    %v139 = vsel %vm77, %v103, %v127
    %v140 = vsel %vm77, %v106, %v130
    %v141 = vsel %vm77, %v109, %v133
    %vm142 = vcmp.eq.s32.totalorder %v76, %v134
    %vm143 = vcmp.eq.s32.totalorder %v76, %v135
    %vm144 = vcmp.eq.s32.totalorder %v76, %v136
    %vm145 = vcmp.eq.s32.totalorder %v76, %v137
    %vm146 = vcmp.eq.s32.totalorder %v76, %v138
    %vm147 = vcmp.eq.s32.totalorder %v76, %v139
    %vm148 = vcmp.eq.s32.totalorder %v76, %v140
    %vm149 = vcmp.eq.s32.totalorder %v76, %v141
    %v150 = vsel %vm142, 1, 0
    %v151 = vsel %vm143, 1, 0
    %v152 = vsel %vm144, 1, 0
    %v153 = vsel %vm145, 1, 0
    %v154 = vsel %vm146, 1, 0
    %v155 = vsel %vm147, 1, 0
    %v156 = vsel %vm148, 1, 0
    %v157 = vsel %vm149, 1, 0
    %v158 = vcvt.s32.f32 %v150
    %v159 = vcvt.s32.f32 %v151
    %v160 = vcvt.s32.f32 %v152
    %v161 = vcvt.s32.f32 %v153
    %v162 = vcvt.s32.f32 %v154
    %v163 = vcvt.s32.f32 %v155
    %v164 = vcvt.s32.f32 %v156
    %v165 = vcvt.s32.f32 %v157
    %v167 = vlaneseq
    %v168 = vshrl.u32 %v167, 7
    %v169 = vsub.s32 0, %v168
    %v170 = vrot.slane %v56, %v169
    %v171 = vlaneseq
    %v172 = vshrl.u32 %v171, 7
    %v173 = vsub.s32 1, %v172
    %v174 = vrot.slane %v56, %v173
    %vm177 = vcmask 261120
    %v179 = vsel %vm177, %v158, 0
    %v182 = vsel %vm177, %v159, 0
    %v185 = vsel %vm177, %v160, 0
    %v188 = vsel %vm177, %v161, 0
    %v191 = vsel %vm177, %v162, 0
    %v194 = vsel %vm177, %v163, 0
    %v197 = vsel %vm177, %v164, 0
    %v200 = vsel %vm177, %v165, 0
    %202 = vmatprep.subr.mxu0 0.0
    %203 = vmatpush1.msra.mxu0 0.0
    %204 = vmatprep.subr.mxu0 0.0
    %205 = vmatpush1.msra.mxu0 0.0
    %206 = vmatprep.subr.mxu0 0.0
    %207 = vmatpush1.msra.mxu0 0.0
    %208 = vmatprep.subr.mxu0 0.0
    %209 = vmatpush1.msra.mxu0 0.0
    %210 = vmatprep.subr.mxu0 0.0
    %211 = vmatpush1.msra.mxu0 0.0
    %212 = vmatprep.subr.mxu0 0.0
    %213 = vmatpush1.msra.mxu0 0.0
    %214 = vmatprep.subr.mxu0 0.0
    %215 = vmatpush1.msra.mxu0 0.0
    %216 = vmatprep.subr.mxu0 0.0
    %217 = vmatpush1.msra.mxu0 0.0
    %218 = vmatprep.subr.mxu0 0.0
    %219 = vmatpush1.msra.mxu0 0.0
    %220 = vmatprep.subr.mxu0 0.0
    %221 = vmatpush1.msra.mxu0 0.0
    %222 = vmatprep.subr.mxu0 0.0
    %223 = vmatpush1.msra.mxu0 0.0
    %224 = vmatprep.subr.mxu0 0.0
    %225 = vmatpush1.msra.mxu0 0.0
    %226 = vmatprep.subr.mxu0 %v38
    %227 = vmatpush1.msra.mxu0 %v37
    %228 = vmatprep.subr.mxu0 %v36
    %229 = vmatpush1.msra.mxu0 %v35
    %230 = vmatprep.subr.mxu0 %v34
    %231 = vmatpush1.msra.mxu0 %v33
    %232 = vmatprep.subr.mxu0 %v32
    %233 = vmatpush1.msra.mxu0 %v31
    %234 = vmatprep.subr.mxu0 0.0
    %235 = vmatpush2.msra.mxu0 0.0
    %236 = vmatprep.subr.mxu0 0.0
    %237 = vmatpush2.msra.mxu0 0.0
    %238 = vmatprep.subr.mxu0 0.0
    %239 = vmatpush2.msra.mxu0 0.0
    %240 = vmatprep.subr.mxu0 0.0
    %241 = vmatpush2.msra.mxu0 0.0
    %242 = vmatprep.subr.mxu0 0.0
    %243 = vmatpush2.msra.mxu0 0.0
    %244 = vmatprep.subr.mxu0 0.0
    %245 = vmatpush2.msra.mxu0 0.0
    %246 = vmatprep.subr.mxu0 0.0
    %247 = vmatpush2.msra.mxu0 0.0
    %248 = vmatprep.subr.mxu0 0.0
    %249 = vmatpush2.msra.mxu0 0.0
    %250 = vmatprep.subr.mxu0 0.0
    %251 = vmatpush2.msra.mxu0 0.0
    %252 = vmatprep.subr.mxu0 0.0
    %253 = vmatpush2.msra.mxu0 0.0
    %254 = vmatprep.subr.mxu0 0.0
    %255 = vmatpush2.msra.mxu0 0.0
    %256 = vmatprep.subr.mxu0 0.0
    %257 = vmatpush2.msra.mxu0 0.0
    %258 = vmatprep.subr.mxu0 0.0
    %259 = vmatpush2.msra.mxu0 0.0
    %260 = vmatprep.subr.mxu0 0.0
    %261 = vmatpush2.msra.mxu0 0.0
    %262 = vmatprep.subr.mxu0 0.0
    %263 = vmatpush2.msra.mxu0 0.0
    %264 = vmatprep.subr.mxu0 0.0
    %265 = vmatpush2.msra.mxu0 0.0
    %266 = vmatprep.mubr.f32.mxu0 0.0
    %267 = vmatmul.mubr.f32.gmra.mxu0 %v179
    %v268 = vpop.f32.mrf.mxu0
    %v269 = vadd.f32 %v170, %v268
    %v270 = vpop.f32.mrf.mxu0
    %v271 = vadd.f32 %v174, %v270
    %272 = vmatprep.mubr.f32.mxu0 0.0
    %273 = vmatmul.mubr.f32.gmra.mxu0 %v182
    %v274 = vpop.f32.mrf.mxu0
    %v275 = vadd.f32 %v170, %v274
    %v276 = vpop.f32.mrf.mxu0
    %v277 = vadd.f32 %v174, %v276
    %278 = vmatprep.mubr.f32.mxu0 0.0
    %279 = vmatmul.mubr.f32.gmra.mxu0 %v185
    %v280 = vpop.f32.mrf.mxu0
    %v281 = vadd.f32 %v170, %v280
    %v282 = vpop.f32.mrf.mxu0
    %v283 = vadd.f32 %v174, %v282
    %284 = vmatprep.mubr.f32.mxu0 0.0
    %285 = vmatmul.mubr.f32.gmra.mxu0 %v188
    %v286 = vpop.f32.mrf.mxu0
    %v287 = vadd.f32 %v170, %v286
    %v288 = vpop.f32.mrf.mxu0
    %v289 = vadd.f32 %v174, %v288
    %290 = vmatprep.mubr.f32.mxu0 0.0
    %291 = vmatmul.mubr.f32.gmra.mxu0 %v191
    %v292 = vpop.f32.mrf.mxu0
    %v293 = vadd.f32 %v170, %v292
    %v294 = vpop.f32.mrf.mxu0
    %v295 = vadd.f32 %v174, %v294
    %296 = vmatprep.mubr.f32.mxu0 0.0
    %297 = vmatmul.mubr.f32.gmra.mxu0 %v194
    %v298 = vpop.f32.mrf.mxu0
    %v299 = vadd.f32 %v170, %v298
    %v300 = vpop.f32.mrf.mxu0
    %v301 = vadd.f32 %v174, %v300
    %302 = vmatprep.mubr.f32.mxu0 0.0
    %303 = vmatmul.mubr.f32.gmra.mxu0 %v197
    %v304 = vpop.f32.mrf.mxu0
    %v305 = vadd.f32 %v170, %v304
    %v306 = vpop.f32.mrf.mxu0
    %v307 = vadd.f32 %v174, %v306
    %308 = vmatprep.mubr.f32.mxu0 0.0
    %309 = vmatmul.mubr.f32.gmra.mxu0 %v200
    %v310 = vpop.f32.mrf.mxu0
    %v311 = vadd.f32 %v170, %v310
    %v312 = vpop.f32.mrf.mxu0
    %v313 = vadd.f32 %v174, %v312
    %314 = vdwg.mxu0
    %v315 = vld [vmem:[%s1] sm:$0xff]
    %vm316 = vcmask 523264
    %v318 = vsel %vm316, %v315, 0
    %320 = vmatprep.subr.mxu0 0.0
    %321 = vmatpush1.msra.mxu0 0.0
    %322 = vmatprep.subr.mxu0 0.0
    %323 = vmatpush1.msra.mxu0 0.0
    %324 = vmatprep.subr.mxu0 0.0
    %325 = vmatpush1.msra.mxu0 0.0
    %326 = vmatprep.subr.mxu0 0.0
    %327 = vmatpush1.msra.mxu0 0.0
    %328 = vmatprep.subr.mxu0 0.0
    %329 = vmatpush1.msra.mxu0 0.0
    %330 = vmatprep.subr.mxu0 0.0
    %331 = vmatpush1.msra.mxu0 0.0
    %332 = vmatprep.subr.mxu0 0.0
    %333 = vmatpush1.msra.mxu0 0.0
    %334 = vmatprep.subr.mxu0 0.0
    %335 = vmatpush1.msra.mxu0 0.0
    %336 = vmatprep.subr.mxu0 %v54
    %337 = vmatpush1.msra.mxu0 %v53
    %338 = vmatprep.subr.mxu0 %v52
    %339 = vmatpush1.msra.mxu0 %v51
    %340 = vmatprep.subr.mxu0 %v50
    %341 = vmatpush1.msra.mxu0 %v49
    %342 = vmatprep.subr.mxu0 %v48
    %343 = vmatpush1.msra.mxu0 %v47
    %344 = vmatprep.subr.mxu0 %v46
    %345 = vmatpush1.msra.mxu0 %v45
    %346 = vmatprep.subr.mxu0 %v44
    %347 = vmatpush1.msra.mxu0 %v43
    %348 = vmatprep.subr.mxu0 %v42
    %349 = vmatpush1.msra.mxu0 %v41
    %350 = vmatprep.subr.mxu0 %v40
    %351 = vmatpush1.msra.mxu0 %v39
    %352 = vmatprep.subr.mxu0 0.0
    %353 = vmatpush2.msra.mxu0 0.0
    %354 = vmatprep.subr.mxu0 0.0
    %355 = vmatpush2.msra.mxu0 0.0
    %356 = vmatprep.subr.mxu0 0.0
    %357 = vmatpush2.msra.mxu0 0.0
    %358 = vmatprep.subr.mxu0 0.0
    %359 = vmatpush2.msra.mxu0 0.0
    %360 = vmatprep.subr.mxu0 0.0
    %361 = vmatpush2.msra.mxu0 0.0
    %362 = vmatprep.subr.mxu0 0.0
    %363 = vmatpush2.msra.mxu0 0.0
    %364 = vmatprep.subr.mxu0 0.0
    %365 = vmatpush2.msra.mxu0 0.0
    %366 = vmatprep.subr.mxu0 0.0
    %367 = vmatpush2.msra.mxu0 0.0
    %368 = vmatprep.subr.mxu0 0.0
    %369 = vmatpush2.msra.mxu0 0.0
    %370 = vmatprep.subr.mxu0 0.0
    %371 = vmatpush2.msra.mxu0 0.0
    %372 = vmatprep.subr.mxu0 0.0
    %373 = vmatpush2.msra.mxu0 0.0
    %374 = vmatprep.subr.mxu0 0.0
    %375 = vmatpush2.msra.mxu0 0.0
    %376 = vmatprep.subr.mxu0 0.0
    %377 = vmatpush2.msra.mxu0 0.0
    %378 = vmatprep.subr.mxu0 0.0
    %379 = vmatpush2.msra.mxu0 0.0
    %380 = vmatprep.subr.mxu0 0.0
    %381 = vmatpush2.msra.mxu0 0.0
    %382 = vmatprep.subr.mxu0 0.0
    %383 = vmatpush2.msra.mxu0 0.0
    %384 = vmatprep.mubr.f32.mxu0 0.0
    %385 = vmatmul.mubr.f32.gmra.mxu0 %v318
    %v386 = vpop.f32.mrf.mxu0
    %v387 = vadd.f32 0.0, %v386
    %v388 = vpop.f32.mrf.mxu0
    %v389 = vadd.f32 0.0, %v388
    %390 = vdwg.mxu0
    %v391 = vadd.f32 %v269, %v387
    %v392 = vxor.u32 %v391, 2147483648
    %v393 = vmul.f32 %v392, 1.442695
    %v394 = vpow.pop %v393
    %v395 = vadd.f32 %v394, 1.0
    %v396 = vrcp.pop %v395
    %v397 = vmul.f32 1.0, %v396
    %v398 = vadd.f32 %v389, %v57
    %v399 = vmul.f32 %v397, %v398
    %v400 = vadd.f32 %v271, %v399
    %v401 = vtanh.pop %v400
    %v402 = vsub.f32 1.0, %v397
    %404 = vrot.lane.b32.xlu0 %v401, 64
    %v405 = vpop.permute.xlu0 %404
    %v407 = vmul.f32 %v402, %v405
    %408 = vrot.lane.b32.xlu0 %v315, 64
    %v409 = vpop.permute.xlu0 %408
    %v411 = vmul.f32 %v397, %v409
    %v412 = vadd.f32 %v407, %v411
    %414 = vrot.lane.b32.xlu0 %v412, 64
    %v415 = vpop.permute.xlu0 %414
    %v416 = vsel %vm316, %v415, 0
    %418 = vmatprep.subr.mxu0 0.0
    %419 = vmatpush1.msra.mxu0 0.0
    %420 = vmatprep.subr.mxu0 0.0
    %421 = vmatpush1.msra.mxu0 0.0
    %422 = vmatprep.subr.mxu0 0.0
    %423 = vmatpush1.msra.mxu0 0.0
    %424 = vmatprep.subr.mxu0 0.0
    %425 = vmatpush1.msra.mxu0 0.0
    %426 = vmatprep.subr.mxu0 0.0
    %427 = vmatpush1.msra.mxu0 0.0
    %428 = vmatprep.subr.mxu0 0.0
    %429 = vmatpush1.msra.mxu0 0.0
    %430 = vmatprep.subr.mxu0 0.0
    %431 = vmatpush1.msra.mxu0 0.0
    %432 = vmatprep.subr.mxu0 0.0
    %433 = vmatpush1.msra.mxu0 0.0
    %434 = vmatprep.subr.mxu0 %v54
    %435 = vmatpush1.msra.mxu0 %v53
    %436 = vmatprep.subr.mxu0 %v52
    %437 = vmatpush1.msra.mxu0 %v51
    %438 = vmatprep.subr.mxu0 %v50
    %439 = vmatpush1.msra.mxu0 %v49
    %440 = vmatprep.subr.mxu0 %v48
    %441 = vmatpush1.msra.mxu0 %v47
    %442 = vmatprep.subr.mxu0 %v46
    %443 = vmatpush1.msra.mxu0 %v45
    %444 = vmatprep.subr.mxu0 %v44
    %445 = vmatpush1.msra.mxu0 %v43
    %446 = vmatprep.subr.mxu0 %v42
    %447 = vmatpush1.msra.mxu0 %v41
    %448 = vmatprep.subr.mxu0 %v40
    %449 = vmatpush1.msra.mxu0 %v39
    %450 = vmatprep.subr.mxu0 0.0
    %451 = vmatpush2.msra.mxu0 0.0
    %452 = vmatprep.subr.mxu0 0.0
    %453 = vmatpush2.msra.mxu0 0.0
    %454 = vmatprep.subr.mxu0 0.0
    %455 = vmatpush2.msra.mxu0 0.0
    %456 = vmatprep.subr.mxu0 0.0
    %457 = vmatpush2.msra.mxu0 0.0
    %458 = vmatprep.subr.mxu0 0.0
    %459 = vmatpush2.msra.mxu0 0.0
    %460 = vmatprep.subr.mxu0 0.0
    %461 = vmatpush2.msra.mxu0 0.0
    %462 = vmatprep.subr.mxu0 0.0
    %463 = vmatpush2.msra.mxu0 0.0
    %464 = vmatprep.subr.mxu0 0.0
    %465 = vmatpush2.msra.mxu0 0.0
    %466 = vmatprep.subr.mxu0 0.0
    %467 = vmatpush2.msra.mxu0 0.0
    %468 = vmatprep.subr.mxu0 0.0
    %469 = vmatpush2.msra.mxu0 0.0
    %470 = vmatprep.subr.mxu0 0.0
    %471 = vmatpush2.msra.mxu0 0.0
    %472 = vmatprep.subr.mxu0 0.0
    %473 = vmatpush2.msra.mxu0 0.0
    %474 = vmatprep.subr.mxu0 0.0
    %475 = vmatpush2.msra.mxu0 0.0
    %476 = vmatprep.subr.mxu0 0.0
    %477 = vmatpush2.msra.mxu0 0.0
    %478 = vmatprep.subr.mxu0 0.0
    %479 = vmatpush2.msra.mxu0 0.0
    %480 = vmatprep.subr.mxu0 0.0
    %481 = vmatpush2.msra.mxu0 0.0
    %482 = vmatprep.mubr.f32.mxu0 0.0
    %483 = vmatmul.mubr.f32.gmra.mxu0 %v416
    %v484 = vpop.f32.mrf.mxu0
    %v485 = vadd.f32 0.0, %v484
    %v486 = vpop.f32.mrf.mxu0
    %v487 = vadd.f32 0.0, %v486
    %488 = vdwg.mxu0
    %v489 = vadd.f32 %v275, %v485
    %v490 = vxor.u32 %v489, 2147483648
    %v491 = vmul.f32 %v490, 1.442695
    %v492 = vpow.pop %v491
    %v493 = vadd.f32 %v492, 1.0
    %v494 = vrcp.pop %v493
    %v495 = vmul.f32 1.0, %v494
    %v496 = vadd.f32 %v487, %v57
    %v497 = vmul.f32 %v495, %v496
    %v498 = vadd.f32 %v277, %v497
    %v499 = vtanh.pop %v498
    %v500 = vsub.f32 1.0, %v495
    %502 = vrot.lane.b32.xlu0 %v499, 64
    %v503 = vpop.permute.xlu0 %502
    %v505 = vmul.f32 %v500, %v503
    %v506 = vmul.f32 %v495, %v412
    %v507 = vadd.f32 %v505, %v506
    %509 = vrot.lane.b32.xlu0 %v507, 64
    %v510 = vpop.permute.xlu0 %509
    %v511 = vsel %vm316, %v510, 0
    %513 = vmatprep.subr.mxu0 0.0
    %514 = vmatpush1.msra.mxu0 0.0
    %515 = vmatprep.subr.mxu0 0.0
    %516 = vmatpush1.msra.mxu0 0.0
    %517 = vmatprep.subr.mxu0 0.0
    %518 = vmatpush1.msra.mxu0 0.0
    %519 = vmatprep.subr.mxu0 0.0
    %520 = vmatpush1.msra.mxu0 0.0
    %521 = vmatprep.subr.mxu0 0.0
    %522 = vmatpush1.msra.mxu0 0.0
    %523 = vmatprep.subr.mxu0 0.0
    %524 = vmatpush1.msra.mxu0 0.0
    %525 = vmatprep.subr.mxu0 0.0
    %526 = vmatpush1.msra.mxu0 0.0
    %527 = vmatprep.subr.mxu0 0.0
    %528 = vmatpush1.msra.mxu0 0.0
    %529 = vmatprep.subr.mxu0 %v54
    %530 = vmatpush1.msra.mxu0 %v53
    %531 = vmatprep.subr.mxu0 %v52
    %532 = vmatpush1.msra.mxu0 %v51
    %533 = vmatprep.subr.mxu0 %v50
    %534 = vmatpush1.msra.mxu0 %v49
    %535 = vmatprep.subr.mxu0 %v48
    %536 = vmatpush1.msra.mxu0 %v47
    %537 = vmatprep.subr.mxu0 %v46
    %538 = vmatpush1.msra.mxu0 %v45
    %539 = vmatprep.subr.mxu0 %v44
    %540 = vmatpush1.msra.mxu0 %v43
    %541 = vmatprep.subr.mxu0 %v42
    %542 = vmatpush1.msra.mxu0 %v41
    %543 = vmatprep.subr.mxu0 %v40
    %544 = vmatpush1.msra.mxu0 %v39
    %545 = vmatprep.subr.mxu0 0.0
    %546 = vmatpush2.msra.mxu0 0.0
    %547 = vmatprep.subr.mxu0 0.0
    %548 = vmatpush2.msra.mxu0 0.0
    %549 = vmatprep.subr.mxu0 0.0
    %550 = vmatpush2.msra.mxu0 0.0
    %551 = vmatprep.subr.mxu0 0.0
    %552 = vmatpush2.msra.mxu0 0.0
    %553 = vmatprep.subr.mxu0 0.0
    %554 = vmatpush2.msra.mxu0 0.0
    %555 = vmatprep.subr.mxu0 0.0
    %556 = vmatpush2.msra.mxu0 0.0
    %557 = vmatprep.subr.mxu0 0.0
    %558 = vmatpush2.msra.mxu0 0.0
    %559 = vmatprep.subr.mxu0 0.0
    %560 = vmatpush2.msra.mxu0 0.0
    %561 = vmatprep.subr.mxu0 0.0
    %562 = vmatpush2.msra.mxu0 0.0
    %563 = vmatprep.subr.mxu0 0.0
    %564 = vmatpush2.msra.mxu0 0.0
    %565 = vmatprep.subr.mxu0 0.0
    %566 = vmatpush2.msra.mxu0 0.0
    %567 = vmatprep.subr.mxu0 0.0
    %568 = vmatpush2.msra.mxu0 0.0
    %569 = vmatprep.subr.mxu0 0.0
    %570 = vmatpush2.msra.mxu0 0.0
    %571 = vmatprep.subr.mxu0 0.0
    %572 = vmatpush2.msra.mxu0 0.0
    %573 = vmatprep.subr.mxu0 0.0
    %574 = vmatpush2.msra.mxu0 0.0
    %575 = vmatprep.subr.mxu0 0.0
    %576 = vmatpush2.msra.mxu0 0.0
    %577 = vmatprep.mubr.f32.mxu0 0.0
    %578 = vmatmul.mubr.f32.gmra.mxu0 %v511
    %v579 = vpop.f32.mrf.mxu0
    %v580 = vadd.f32 0.0, %v579
    %v581 = vpop.f32.mrf.mxu0
    %v582 = vadd.f32 0.0, %v581
    %583 = vdwg.mxu0
    %v584 = vadd.f32 %v281, %v580
    %v585 = vxor.u32 %v584, 2147483648
    %v586 = vmul.f32 %v585, 1.442695
    %v587 = vpow.pop %v586
    %v588 = vadd.f32 %v587, 1.0
    %v589 = vrcp.pop %v588
    %v590 = vmul.f32 1.0, %v589
    %v591 = vadd.f32 %v582, %v57
    %v592 = vmul.f32 %v590, %v591
    %v593 = vadd.f32 %v283, %v592
    %v594 = vtanh.pop %v593
    %v595 = vsub.f32 1.0, %v590
    %597 = vrot.lane.b32.xlu0 %v594, 64
    %v598 = vpop.permute.xlu0 %597
    %v600 = vmul.f32 %v595, %v598
    %v601 = vmul.f32 %v590, %v507
    %v602 = vadd.f32 %v600, %v601
    %604 = vrot.lane.b32.xlu0 %v602, 64
    %v605 = vpop.permute.xlu0 %604
    %v606 = vsel %vm316, %v605, 0
    %608 = vmatprep.subr.mxu0 0.0
    %609 = vmatpush1.msra.mxu0 0.0
    %610 = vmatprep.subr.mxu0 0.0
    %611 = vmatpush1.msra.mxu0 0.0
    %612 = vmatprep.subr.mxu0 0.0
    %613 = vmatpush1.msra.mxu0 0.0
    %614 = vmatprep.subr.mxu0 0.0
    %615 = vmatpush1.msra.mxu0 0.0
    %616 = vmatprep.subr.mxu0 0.0
    %617 = vmatpush1.msra.mxu0 0.0
    %618 = vmatprep.subr.mxu0 0.0
    %619 = vmatpush1.msra.mxu0 0.0
    %620 = vmatprep.subr.mxu0 0.0
    %621 = vmatpush1.msra.mxu0 0.0
    %622 = vmatprep.subr.mxu0 0.0
    %623 = vmatpush1.msra.mxu0 0.0
    %624 = vmatprep.subr.mxu0 %v54
    %625 = vmatpush1.msra.mxu0 %v53
    %626 = vmatprep.subr.mxu0 %v52
    %627 = vmatpush1.msra.mxu0 %v51
    %628 = vmatprep.subr.mxu0 %v50
    %629 = vmatpush1.msra.mxu0 %v49
    %630 = vmatprep.subr.mxu0 %v48
    %631 = vmatpush1.msra.mxu0 %v47
    %632 = vmatprep.subr.mxu0 %v46
    %633 = vmatpush1.msra.mxu0 %v45
    %634 = vmatprep.subr.mxu0 %v44
    %635 = vmatpush1.msra.mxu0 %v43
    %636 = vmatprep.subr.mxu0 %v42
    %637 = vmatpush1.msra.mxu0 %v41
    %638 = vmatprep.subr.mxu0 %v40
    %639 = vmatpush1.msra.mxu0 %v39
    %640 = vmatprep.subr.mxu0 0.0
    %641 = vmatpush2.msra.mxu0 0.0
    %642 = vmatprep.subr.mxu0 0.0
    %643 = vmatpush2.msra.mxu0 0.0
    %644 = vmatprep.subr.mxu0 0.0
    %645 = vmatpush2.msra.mxu0 0.0
    %646 = vmatprep.subr.mxu0 0.0
    %647 = vmatpush2.msra.mxu0 0.0
    %648 = vmatprep.subr.mxu0 0.0
    %649 = vmatpush2.msra.mxu0 0.0
    %650 = vmatprep.subr.mxu0 0.0
    %651 = vmatpush2.msra.mxu0 0.0
    %652 = vmatprep.subr.mxu0 0.0
    %653 = vmatpush2.msra.mxu0 0.0
    %654 = vmatprep.subr.mxu0 0.0
    %655 = vmatpush2.msra.mxu0 0.0
    %656 = vmatprep.subr.mxu0 0.0
    %657 = vmatpush2.msra.mxu0 0.0
    %658 = vmatprep.subr.mxu0 0.0
    %659 = vmatpush2.msra.mxu0 0.0
    %660 = vmatprep.subr.mxu0 0.0
    %661 = vmatpush2.msra.mxu0 0.0
    %662 = vmatprep.subr.mxu0 0.0
    %663 = vmatpush2.msra.mxu0 0.0
    %664 = vmatprep.subr.mxu0 0.0
    %665 = vmatpush2.msra.mxu0 0.0
    %666 = vmatprep.subr.mxu0 0.0
    %667 = vmatpush2.msra.mxu0 0.0
    %668 = vmatprep.subr.mxu0 0.0
    %669 = vmatpush2.msra.mxu0 0.0
    %670 = vmatprep.subr.mxu0 0.0
    %671 = vmatpush2.msra.mxu0 0.0
    %672 = vmatprep.mubr.f32.mxu0 0.0
    %673 = vmatmul.mubr.f32.gmra.mxu0 %v606
    %v674 = vpop.f32.mrf.mxu0
    %v675 = vadd.f32 0.0, %v674
    %v676 = vpop.f32.mrf.mxu0
    %v677 = vadd.f32 0.0, %v676
    %678 = vdwg.mxu0
    %v679 = vadd.f32 %v287, %v675
    %v680 = vxor.u32 %v679, 2147483648
    %v681 = vmul.f32 %v680, 1.442695
    %v682 = vpow.pop %v681
    %v683 = vadd.f32 %v682, 1.0
    %v684 = vrcp.pop %v683
    %v685 = vmul.f32 1.0, %v684
    %v686 = vadd.f32 %v677, %v57
    %v687 = vmul.f32 %v685, %v686
    %v688 = vadd.f32 %v289, %v687
    %v689 = vtanh.pop %v688
    %v690 = vsub.f32 1.0, %v685
    %692 = vrot.lane.b32.xlu0 %v689, 64
    %v693 = vpop.permute.xlu0 %692
    %v695 = vmul.f32 %v690, %v693
    %v696 = vmul.f32 %v685, %v602
    %v697 = vadd.f32 %v695, %v696
    %699 = vrot.lane.b32.xlu0 %v697, 64
    %v700 = vpop.permute.xlu0 %699
    %v701 = vsel %vm316, %v700, 0
    %703 = vmatprep.subr.mxu0 0.0
    %704 = vmatpush1.msra.mxu0 0.0
    %705 = vmatprep.subr.mxu0 0.0
    %706 = vmatpush1.msra.mxu0 0.0
    %707 = vmatprep.subr.mxu0 0.0
    %708 = vmatpush1.msra.mxu0 0.0
    %709 = vmatprep.subr.mxu0 0.0
    %710 = vmatpush1.msra.mxu0 0.0
    %711 = vmatprep.subr.mxu0 0.0
    %712 = vmatpush1.msra.mxu0 0.0
    %713 = vmatprep.subr.mxu0 0.0
    %714 = vmatpush1.msra.mxu0 0.0
    %715 = vmatprep.subr.mxu0 0.0
    %716 = vmatpush1.msra.mxu0 0.0
    %717 = vmatprep.subr.mxu0 0.0
    %718 = vmatpush1.msra.mxu0 0.0
    %719 = vmatprep.subr.mxu0 %v54
    %720 = vmatpush1.msra.mxu0 %v53
    %721 = vmatprep.subr.mxu0 %v52
    %722 = vmatpush1.msra.mxu0 %v51
    %723 = vmatprep.subr.mxu0 %v50
    %724 = vmatpush1.msra.mxu0 %v49
    %725 = vmatprep.subr.mxu0 %v48
    %726 = vmatpush1.msra.mxu0 %v47
    %727 = vmatprep.subr.mxu0 %v46
    %728 = vmatpush1.msra.mxu0 %v45
    %729 = vmatprep.subr.mxu0 %v44
    %730 = vmatpush1.msra.mxu0 %v43
    %731 = vmatprep.subr.mxu0 %v42
    %732 = vmatpush1.msra.mxu0 %v41
    %733 = vmatprep.subr.mxu0 %v40
    %734 = vmatpush1.msra.mxu0 %v39
    %735 = vmatprep.subr.mxu0 0.0
    %736 = vmatpush2.msra.mxu0 0.0
    %737 = vmatprep.subr.mxu0 0.0
    %738 = vmatpush2.msra.mxu0 0.0
    %739 = vmatprep.subr.mxu0 0.0
    %740 = vmatpush2.msra.mxu0 0.0
    %741 = vmatprep.subr.mxu0 0.0
    %742 = vmatpush2.msra.mxu0 0.0
    %743 = vmatprep.subr.mxu0 0.0
    %744 = vmatpush2.msra.mxu0 0.0
    %745 = vmatprep.subr.mxu0 0.0
    %746 = vmatpush2.msra.mxu0 0.0
    %747 = vmatprep.subr.mxu0 0.0
    %748 = vmatpush2.msra.mxu0 0.0
    %749 = vmatprep.subr.mxu0 0.0
    %750 = vmatpush2.msra.mxu0 0.0
    %751 = vmatprep.subr.mxu0 0.0
    %752 = vmatpush2.msra.mxu0 0.0
    %753 = vmatprep.subr.mxu0 0.0
    %754 = vmatpush2.msra.mxu0 0.0
    %755 = vmatprep.subr.mxu0 0.0
    %756 = vmatpush2.msra.mxu0 0.0
    %757 = vmatprep.subr.mxu0 0.0
    %758 = vmatpush2.msra.mxu0 0.0
    %759 = vmatprep.subr.mxu0 0.0
    %760 = vmatpush2.msra.mxu0 0.0
    %761 = vmatprep.subr.mxu0 0.0
    %762 = vmatpush2.msra.mxu0 0.0
    %763 = vmatprep.subr.mxu0 0.0
    %764 = vmatpush2.msra.mxu0 0.0
    %765 = vmatprep.subr.mxu0 0.0
    %766 = vmatpush2.msra.mxu0 0.0
    %767 = vmatprep.mubr.f32.mxu0 0.0
    %768 = vmatmul.mubr.f32.gmra.mxu0 %v701
    %v769 = vpop.f32.mrf.mxu0
    %v770 = vadd.f32 0.0, %v769
    %v771 = vpop.f32.mrf.mxu0
    %v772 = vadd.f32 0.0, %v771
    %773 = vdwg.mxu0
    %v774 = vadd.f32 %v293, %v770
    %v775 = vxor.u32 %v774, 2147483648
    %v776 = vmul.f32 %v775, 1.442695
    %v777 = vpow.pop %v776
    %v778 = vadd.f32 %v777, 1.0
    %v779 = vrcp.pop %v778
    %v780 = vmul.f32 1.0, %v779
    %v781 = vadd.f32 %v772, %v57
    %v782 = vmul.f32 %v780, %v781
    %v783 = vadd.f32 %v295, %v782
    %v784 = vtanh.pop %v783
    %v785 = vsub.f32 1.0, %v780
    %787 = vrot.lane.b32.xlu0 %v784, 64
    %v788 = vpop.permute.xlu0 %787
    %v790 = vmul.f32 %v785, %v788
    %v791 = vmul.f32 %v780, %v697
    %v792 = vadd.f32 %v790, %v791
    %794 = vrot.lane.b32.xlu0 %v792, 64
    %v795 = vpop.permute.xlu0 %794
    %v796 = vsel %vm316, %v795, 0
    %798 = vmatprep.subr.mxu0 0.0
    %799 = vmatpush1.msra.mxu0 0.0
    %800 = vmatprep.subr.mxu0 0.0
    %801 = vmatpush1.msra.mxu0 0.0
    %802 = vmatprep.subr.mxu0 0.0
    %803 = vmatpush1.msra.mxu0 0.0
    %804 = vmatprep.subr.mxu0 0.0
    %805 = vmatpush1.msra.mxu0 0.0
    %806 = vmatprep.subr.mxu0 0.0
    %807 = vmatpush1.msra.mxu0 0.0
    %808 = vmatprep.subr.mxu0 0.0
    %809 = vmatpush1.msra.mxu0 0.0
    %810 = vmatprep.subr.mxu0 0.0
    %811 = vmatpush1.msra.mxu0 0.0
    %812 = vmatprep.subr.mxu0 0.0
    %813 = vmatpush1.msra.mxu0 0.0
    %814 = vmatprep.subr.mxu0 %v54
    %815 = vmatpush1.msra.mxu0 %v53
    %816 = vmatprep.subr.mxu0 %v52
    %817 = vmatpush1.msra.mxu0 %v51
    %818 = vmatprep.subr.mxu0 %v50
    %819 = vmatpush1.msra.mxu0 %v49
    %820 = vmatprep.subr.mxu0 %v48
    %821 = vmatpush1.msra.mxu0 %v47
    %822 = vmatprep.subr.mxu0 %v46
    %823 = vmatpush1.msra.mxu0 %v45
    %824 = vmatprep.subr.mxu0 %v44
    %825 = vmatpush1.msra.mxu0 %v43
    %826 = vmatprep.subr.mxu0 %v42
    %827 = vmatpush1.msra.mxu0 %v41
    %828 = vmatprep.subr.mxu0 %v40
    %829 = vmatpush1.msra.mxu0 %v39
    %830 = vmatprep.subr.mxu0 0.0
    %831 = vmatpush2.msra.mxu0 0.0
    %832 = vmatprep.subr.mxu0 0.0
    %833 = vmatpush2.msra.mxu0 0.0
    %834 = vmatprep.subr.mxu0 0.0
    %835 = vmatpush2.msra.mxu0 0.0
    %836 = vmatprep.subr.mxu0 0.0
    %837 = vmatpush2.msra.mxu0 0.0
    %838 = vmatprep.subr.mxu0 0.0
    %839 = vmatpush2.msra.mxu0 0.0
    %840 = vmatprep.subr.mxu0 0.0
    %841 = vmatpush2.msra.mxu0 0.0
    %842 = vmatprep.subr.mxu0 0.0
    %843 = vmatpush2.msra.mxu0 0.0
    %844 = vmatprep.subr.mxu0 0.0
    %845 = vmatpush2.msra.mxu0 0.0
    %846 = vmatprep.subr.mxu0 0.0
    %847 = vmatpush2.msra.mxu0 0.0
    %848 = vmatprep.subr.mxu0 0.0
    %849 = vmatpush2.msra.mxu0 0.0
    %850 = vmatprep.subr.mxu0 0.0
    %851 = vmatpush2.msra.mxu0 0.0
    %852 = vmatprep.subr.mxu0 0.0
    %853 = vmatpush2.msra.mxu0 0.0
    %854 = vmatprep.subr.mxu0 0.0
    %855 = vmatpush2.msra.mxu0 0.0
    %856 = vmatprep.subr.mxu0 0.0
    %857 = vmatpush2.msra.mxu0 0.0
    %858 = vmatprep.subr.mxu0 0.0
    %859 = vmatpush2.msra.mxu0 0.0
    %860 = vmatprep.subr.mxu0 0.0
    %861 = vmatpush2.msra.mxu0 0.0
    %862 = vmatprep.mubr.f32.mxu0 0.0
    %863 = vmatmul.mubr.f32.gmra.mxu0 %v796
    %v864 = vpop.f32.mrf.mxu0
    %v865 = vadd.f32 0.0, %v864
    %v866 = vpop.f32.mrf.mxu0
    %v867 = vadd.f32 0.0, %v866
    %868 = vdwg.mxu0
    %v869 = vadd.f32 %v299, %v865
    %v870 = vxor.u32 %v869, 2147483648
    %v871 = vmul.f32 %v870, 1.442695
    %v872 = vpow.pop %v871
    %v873 = vadd.f32 %v872, 1.0
    %v874 = vrcp.pop %v873
    %v875 = vmul.f32 1.0, %v874
    %v876 = vadd.f32 %v867, %v57
    %v877 = vmul.f32 %v875, %v876
    %v878 = vadd.f32 %v301, %v877
    %v879 = vtanh.pop %v878
    %v880 = vsub.f32 1.0, %v875
    %882 = vrot.lane.b32.xlu0 %v879, 64
    %v883 = vpop.permute.xlu0 %882
    %v885 = vmul.f32 %v880, %v883
    %v886 = vmul.f32 %v875, %v792
    %v887 = vadd.f32 %v885, %v886
    %889 = vrot.lane.b32.xlu0 %v887, 64
    %v890 = vpop.permute.xlu0 %889
    %v891 = vsel %vm316, %v890, 0
    %893 = vmatprep.subr.mxu0 0.0
    %894 = vmatpush1.msra.mxu0 0.0
    %895 = vmatprep.subr.mxu0 0.0
    %896 = vmatpush1.msra.mxu0 0.0
    %897 = vmatprep.subr.mxu0 0.0
    %898 = vmatpush1.msra.mxu0 0.0
    %899 = vmatprep.subr.mxu0 0.0
    %900 = vmatpush1.msra.mxu0 0.0
    %901 = vmatprep.subr.mxu0 0.0
    %902 = vmatpush1.msra.mxu0 0.0
    %903 = vmatprep.subr.mxu0 0.0
    %904 = vmatpush1.msra.mxu0 0.0
    %905 = vmatprep.subr.mxu0 0.0
    %906 = vmatpush1.msra.mxu0 0.0
    %907 = vmatprep.subr.mxu0 0.0
    %908 = vmatpush1.msra.mxu0 0.0
    %909 = vmatprep.subr.mxu0 %v54
    %910 = vmatpush1.msra.mxu0 %v53
    %911 = vmatprep.subr.mxu0 %v52
    %912 = vmatpush1.msra.mxu0 %v51
    %913 = vmatprep.subr.mxu0 %v50
    %914 = vmatpush1.msra.mxu0 %v49
    %915 = vmatprep.subr.mxu0 %v48
    %916 = vmatpush1.msra.mxu0 %v47
    %917 = vmatprep.subr.mxu0 %v46
    %918 = vmatpush1.msra.mxu0 %v45
    %919 = vmatprep.subr.mxu0 %v44
    %920 = vmatpush1.msra.mxu0 %v43
    %921 = vmatprep.subr.mxu0 %v42
    %922 = vmatpush1.msra.mxu0 %v41
    %923 = vmatprep.subr.mxu0 %v40
    %924 = vmatpush1.msra.mxu0 %v39
    %925 = vmatprep.subr.mxu0 0.0
    %926 = vmatpush2.msra.mxu0 0.0
    %927 = vmatprep.subr.mxu0 0.0
    %928 = vmatpush2.msra.mxu0 0.0
    %929 = vmatprep.subr.mxu0 0.0
    %930 = vmatpush2.msra.mxu0 0.0
    %931 = vmatprep.subr.mxu0 0.0
    %932 = vmatpush2.msra.mxu0 0.0
    %933 = vmatprep.subr.mxu0 0.0
    %934 = vmatpush2.msra.mxu0 0.0
    %935 = vmatprep.subr.mxu0 0.0
    %936 = vmatpush2.msra.mxu0 0.0
    %937 = vmatprep.subr.mxu0 0.0
    %938 = vmatpush2.msra.mxu0 0.0
    %939 = vmatprep.subr.mxu0 0.0
    %940 = vmatpush2.msra.mxu0 0.0
    %941 = vmatprep.subr.mxu0 0.0
    %942 = vmatpush2.msra.mxu0 0.0
    %943 = vmatprep.subr.mxu0 0.0
    %944 = vmatpush2.msra.mxu0 0.0
    %945 = vmatprep.subr.mxu0 0.0
    %946 = vmatpush2.msra.mxu0 0.0
    %947 = vmatprep.subr.mxu0 0.0
    %948 = vmatpush2.msra.mxu0 0.0
    %949 = vmatprep.subr.mxu0 0.0
    %950 = vmatpush2.msra.mxu0 0.0
    %951 = vmatprep.subr.mxu0 0.0
    %952 = vmatpush2.msra.mxu0 0.0
    %953 = vmatprep.subr.mxu0 0.0
    %954 = vmatpush2.msra.mxu0 0.0
    %955 = vmatprep.subr.mxu0 0.0
    %956 = vmatpush2.msra.mxu0 0.0
    %957 = vmatprep.mubr.f32.mxu0 0.0
    %958 = vmatmul.mubr.f32.gmra.mxu0 %v891
    %v959 = vpop.f32.mrf.mxu0
    %v960 = vadd.f32 0.0, %v959
    %v961 = vpop.f32.mrf.mxu0
    %v962 = vadd.f32 0.0, %v961
    %963 = vdwg.mxu0
    %v964 = vadd.f32 %v305, %v960
    %v965 = vxor.u32 %v964, 2147483648
    %v966 = vmul.f32 %v965, 1.442695
    %v967 = vpow.pop %v966
    %v968 = vadd.f32 %v967, 1.0
    %v969 = vrcp.pop %v968
    %v970 = vmul.f32 1.0, %v969
    %v971 = vadd.f32 %v962, %v57
    %v972 = vmul.f32 %v970, %v971
    %v973 = vadd.f32 %v307, %v972
    %v974 = vtanh.pop %v973
    %v975 = vsub.f32 1.0, %v970
    %977 = vrot.lane.b32.xlu0 %v974, 64
    %v978 = vpop.permute.xlu0 %977
    %v980 = vmul.f32 %v975, %v978
    %v981 = vmul.f32 %v970, %v887
    %v982 = vadd.f32 %v980, %v981
    %984 = vrot.lane.b32.xlu0 %v982, 64
    %v985 = vpop.permute.xlu0 %984
    %v986 = vsel %vm316, %v985, 0
    %988 = vmatprep.subr.mxu0 0.0
    %989 = vmatpush1.msra.mxu0 0.0
    %990 = vmatprep.subr.mxu0 0.0
    %991 = vmatpush1.msra.mxu0 0.0
    %992 = vmatprep.subr.mxu0 0.0
    %993 = vmatpush1.msra.mxu0 0.0
    %994 = vmatprep.subr.mxu0 0.0
    %995 = vmatpush1.msra.mxu0 0.0
    %996 = vmatprep.subr.mxu0 0.0
    %997 = vmatpush1.msra.mxu0 0.0
    %998 = vmatprep.subr.mxu0 0.0
    %999 = vmatpush1.msra.mxu0 0.0
    %1000 = vmatprep.subr.mxu0 0.0
    %1001 = vmatpush1.msra.mxu0 0.0
    %1002 = vmatprep.subr.mxu0 0.0
    %1003 = vmatpush1.msra.mxu0 0.0
    %1004 = vmatprep.subr.mxu0 %v54
    %1005 = vmatpush1.msra.mxu0 %v53
    %1006 = vmatprep.subr.mxu0 %v52
    %1007 = vmatpush1.msra.mxu0 %v51
    %1008 = vmatprep.subr.mxu0 %v50
    %1009 = vmatpush1.msra.mxu0 %v49
    %1010 = vmatprep.subr.mxu0 %v48
    %1011 = vmatpush1.msra.mxu0 %v47
    %1012 = vmatprep.subr.mxu0 %v46
    %1013 = vmatpush1.msra.mxu0 %v45
    %1014 = vmatprep.subr.mxu0 %v44
    %1015 = vmatpush1.msra.mxu0 %v43
    %1016 = vmatprep.subr.mxu0 %v42
    %1017 = vmatpush1.msra.mxu0 %v41
    %1018 = vmatprep.subr.mxu0 %v40
    %1019 = vmatpush1.msra.mxu0 %v39
    %1020 = vmatprep.subr.mxu0 0.0
    %1021 = vmatpush2.msra.mxu0 0.0
    %1022 = vmatprep.subr.mxu0 0.0
    %1023 = vmatpush2.msra.mxu0 0.0
    %1024 = vmatprep.subr.mxu0 0.0
    %1025 = vmatpush2.msra.mxu0 0.0
    %1026 = vmatprep.subr.mxu0 0.0
    %1027 = vmatpush2.msra.mxu0 0.0
    %1028 = vmatprep.subr.mxu0 0.0
    %1029 = vmatpush2.msra.mxu0 0.0
    %1030 = vmatprep.subr.mxu0 0.0
    %1031 = vmatpush2.msra.mxu0 0.0
    %1032 = vmatprep.subr.mxu0 0.0
    %1033 = vmatpush2.msra.mxu0 0.0
    %1034 = vmatprep.subr.mxu0 0.0
    %1035 = vmatpush2.msra.mxu0 0.0
    %1036 = vmatprep.subr.mxu0 0.0
    %1037 = vmatpush2.msra.mxu0 0.0
    %1038 = vmatprep.subr.mxu0 0.0
    %1039 = vmatpush2.msra.mxu0 0.0
    %1040 = vmatprep.subr.mxu0 0.0
    %1041 = vmatpush2.msra.mxu0 0.0
    %1042 = vmatprep.subr.mxu0 0.0
    %1043 = vmatpush2.msra.mxu0 0.0
    %1044 = vmatprep.subr.mxu0 0.0
    %1045 = vmatpush2.msra.mxu0 0.0
    %1046 = vmatprep.subr.mxu0 0.0
    %1047 = vmatpush2.msra.mxu0 0.0
    %1048 = vmatprep.subr.mxu0 0.0
    %1049 = vmatpush2.msra.mxu0 0.0
    %1050 = vmatprep.subr.mxu0 0.0
    %1051 = vmatpush2.msra.mxu0 0.0
    %1052 = vmatprep.mubr.f32.mxu0 0.0
    %1053 = vmatmul.mubr.f32.gmra.mxu0 %v986
    %v1054 = vpop.f32.mrf.mxu0
    %v1055 = vadd.f32 0.0, %v1054
    %v1056 = vpop.f32.mrf.mxu0
    %v1057 = vadd.f32 0.0, %v1056
    %1058 = vdwg.mxu0
    %v1059 = vadd.f32 %v311, %v1055
    %v1060 = vxor.u32 %v1059, 2147483648
    %v1061 = vmul.f32 %v1060, 1.442695
    %v1062 = vpow.pop %v1061
    %v1063 = vadd.f32 %v1062, 1.0
    %v1064 = vrcp.pop %v1063
    %v1065 = vmul.f32 1.0, %v1064
    %v1066 = vadd.f32 %v1057, %v57
    %v1067 = vmul.f32 %v1065, %v1066
    %v1068 = vadd.f32 %v313, %v1067
    %v1069 = vtanh.pop %v1068
    %v1070 = vsub.f32 1.0, %v1065
    %1072 = vrot.lane.b32.xlu0 %v1069, 64
    %v1073 = vpop.permute.xlu0 %1072
    %v1075 = vmul.f32 %v1070, %v1073
    %v1076 = vmul.f32 %v1065, %v982
    %v1077 = vadd.f32 %v1075, %v1076
    %vm1078 = vcmp.lt.s32.totalorder %v76, 32
    %1081 = vrot.lane.b32.xlu0 %v1077, 64
    %v1082 = vpop.permute.xlu0 %1081
    %v1084 = vsel %vm1078, %v415, %v1082
    %v1087 = vsel %vm1078, %v510, %v985
    %v1090 = vsel %vm1078, %v605, %v890
    %v1093 = vsel %vm1078, %v700, %v795
    %v1094 = vsel %vm1078, %v795, %v700
    %v1095 = vsel %vm1078, %v890, %v605
    %v1096 = vsel %vm1078, %v985, %v510
    %v1097 = vsel %vm1078, %v1082, %v415
    %v1099 = vsel %vm316, %v1084, 0
    %v1102 = vsel %vm316, %v1087, 0
    %v1105 = vsel %vm316, %v1090, 0
    %v1108 = vsel %vm316, %v1093, 0
    %v1111 = vsel %vm316, %v1094, 0
    %v1114 = vsel %vm316, %v1095, 0
    %v1117 = vsel %vm316, %v1096, 0
    %v1120 = vsel %vm316, %v1097, 0
    %1122 = vmatprep.subr.mxu0 0.0
    %1123 = vmatpush1.msra.mxu0 0.0
    %1124 = vmatprep.subr.mxu0 0.0
    %1125 = vmatpush1.msra.mxu0 0.0
    %1126 = vmatprep.subr.mxu0 0.0
    %1127 = vmatpush1.msra.mxu0 0.0
    %1128 = vmatprep.subr.mxu0 0.0
    %1129 = vmatpush1.msra.mxu0 0.0
    %1130 = vmatprep.subr.mxu0 0.0
    %1131 = vmatpush1.msra.mxu0 0.0
    %1132 = vmatprep.subr.mxu0 0.0
    %1133 = vmatpush1.msra.mxu0 0.0
    %1134 = vmatprep.subr.mxu0 0.0
    %1135 = vmatpush1.msra.mxu0 0.0
    %1136 = vmatprep.subr.mxu0 0.0
    %1137 = vmatpush1.msra.mxu0 0.0
    %1138 = vmatprep.subr.mxu0 0.0
    %1139 = vmatpush1.msra.mxu0 %v65
    %1140 = vmatprep.subr.mxu0 0.0
    %1141 = vmatpush1.msra.mxu0 %v64
    %1142 = vmatprep.subr.mxu0 0.0
    %1143 = vmatpush1.msra.mxu0 %v63
    %1144 = vmatprep.subr.mxu0 0.0
    %1145 = vmatpush1.msra.mxu0 %v62
    %1146 = vmatprep.subr.mxu0 0.0
    %1147 = vmatpush1.msra.mxu0 %v61
    %1148 = vmatprep.subr.mxu0 0.0
    %1149 = vmatpush1.msra.mxu0 %v60
    %1150 = vmatprep.subr.mxu0 0.0
    %1151 = vmatpush1.msra.mxu0 %v59
    %1152 = vmatprep.subr.mxu0 0.0
    %1153 = vmatpush1.msra.mxu0 %v58
    %1154 = vmatprep.subr.mxu0 0.0
    %1155 = vmatpush2.msra.mxu0 0.0
    %1156 = vmatprep.subr.mxu0 0.0
    %1157 = vmatpush2.msra.mxu0 0.0
    %1158 = vmatprep.subr.mxu0 0.0
    %1159 = vmatpush2.msra.mxu0 0.0
    %1160 = vmatprep.subr.mxu0 0.0
    %1161 = vmatpush2.msra.mxu0 0.0
    %1162 = vmatprep.subr.mxu0 0.0
    %1163 = vmatpush2.msra.mxu0 0.0
    %1164 = vmatprep.subr.mxu0 0.0
    %1165 = vmatpush2.msra.mxu0 0.0
    %1166 = vmatprep.subr.mxu0 0.0
    %1167 = vmatpush2.msra.mxu0 0.0
    %1168 = vmatprep.subr.mxu0 0.0
    %1169 = vmatpush2.msra.mxu0 0.0
    %1170 = vmatprep.subr.mxu0 0.0
    %1171 = vmatpush2.msra.mxu0 0.0
    %1172 = vmatprep.subr.mxu0 0.0
    %1173 = vmatpush2.msra.mxu0 0.0
    %1174 = vmatprep.subr.mxu0 0.0
    %1175 = vmatpush2.msra.mxu0 0.0
    %1176 = vmatprep.subr.mxu0 0.0
    %1177 = vmatpush2.msra.mxu0 0.0
    %1178 = vmatprep.subr.mxu0 0.0
    %1179 = vmatpush2.msra.mxu0 0.0
    %1180 = vmatprep.subr.mxu0 0.0
    %1181 = vmatpush2.msra.mxu0 0.0
    %1182 = vmatprep.subr.mxu0 0.0
    %1183 = vmatpush2.msra.mxu0 0.0
    %1184 = vmatprep.subr.mxu0 0.0
    %1185 = vmatpush2.msra.mxu0 0.0
    %1186 = vmatprep.mubr.f32.mxu0 0.0
    %1187 = vmatmul.mubr.f32.gmra.mxu0 %v1099
    %v1188 = vpop.f32.mrf.mxu0
    %v1189 = vadd.f32 %v66, %v1188
    %v1190 = vpop.f32.mrf.mxu0
    %1191 = vmatprep.mubr.f32.mxu0 0.0
    %1192 = vmatmul.mubr.f32.gmra.mxu0 %v1102
    %v1193 = vpop.f32.mrf.mxu0
    %v1194 = vadd.f32 %v66, %v1193
    %v1195 = vpop.f32.mrf.mxu0
    %1196 = vmatprep.mubr.f32.mxu0 0.0
    %1197 = vmatmul.mubr.f32.gmra.mxu0 %v1105
    %v1198 = vpop.f32.mrf.mxu0
    %v1199 = vadd.f32 %v66, %v1198
    %v1200 = vpop.f32.mrf.mxu0
    %1201 = vmatprep.mubr.f32.mxu0 0.0
    %1202 = vmatmul.mubr.f32.gmra.mxu0 %v1108
    %v1203 = vpop.f32.mrf.mxu0
    %v1204 = vadd.f32 %v66, %v1203
    %v1205 = vpop.f32.mrf.mxu0
    %1206 = vmatprep.mubr.f32.mxu0 0.0
    %1207 = vmatmul.mubr.f32.gmra.mxu0 %v1111
    %v1208 = vpop.f32.mrf.mxu0
    %v1209 = vadd.f32 %v66, %v1208
    %v1210 = vpop.f32.mrf.mxu0
    %1211 = vmatprep.mubr.f32.mxu0 0.0
    %1212 = vmatmul.mubr.f32.gmra.mxu0 %v1114
    %v1213 = vpop.f32.mrf.mxu0
    %v1214 = vadd.f32 %v66, %v1213
    %v1215 = vpop.f32.mrf.mxu0
    %1216 = vmatprep.mubr.f32.mxu0 0.0
    %1217 = vmatmul.mubr.f32.gmra.mxu0 %v1117
    %v1218 = vpop.f32.mrf.mxu0
    %v1219 = vadd.f32 %v66, %v1218
    %v1220 = vpop.f32.mrf.mxu0
    %1221 = vmatprep.mubr.f32.mxu0 0.0
    %1222 = vmatmul.mubr.f32.gmra.mxu0 %v1120
    %v1223 = vpop.f32.mrf.mxu0
    %v1224 = vadd.f32 %v66, %v1223
    %v1225 = vpop.f32.mrf.mxu0
    %1226 = vdwg.mxu0
    %1227 = vst.msk [vmem:[%s3] sm:$0xff] %vm177, %v1189
    %1228 = vst.msk [vmem:[%s3 + $0x8] sm:$0xff] %vm177, %v1194
    %1229 = vst.msk [vmem:[%s3 + $0x10] sm:$0xff] %vm177, %v1199
    %1230 = vst.msk [vmem:[%s3 + $0x18] sm:$0xff] %vm177, %v1204
    %1231 = vst.msk [vmem:[%s3 + $0x20] sm:$0xff] %vm177, %v1209
    %1232 = vst.msk [vmem:[%s3 + $0x28] sm:$0xff] %vm177, %v1214
    %1233 = vst.msk [vmem:[%s3 + $0x30] sm:$0xff] %vm177, %v1219
    %1234 = vst.msk [vmem:[%s3 + $0x38] sm:$0xff] %vm177, %v1224
    %1235 = vst.msk [vmem:[#allocation5] sm:$0xff] %vm316, %v1082
    // Predicated region
    $region18: #{tpu_custom_call.1} parent=1 // pred_check
      _
    $region19: #{tpu_custom_call.1} parent=1 // pred_check_branch
      %1237 = sbr.rel (0) target = $region21
    $region20: #{tpu_custom_call.1} parent=1 // pred_region
      _
    $region21: #{tpu_custom_call.1} parent=1 // pred_fallthru
      _
    // Predicated region
    $region22: #{tpu_custom_call.1} parent=1 // pred_check
      _
    $region23: #{tpu_custom_call.1} parent=1 // pred_check_branch
      %1239 = sbr.rel (0) target = $region25
    $region24: #{tpu_custom_call.1} parent=1 // pred_region
      %s1241 = ssub.s32 128, 128
      %1242 = vsyncadd [#allocation4], %s1241
      %s1244 = sshll.u32 [#allocation5], 4
      %s1245 = int_to_ptr.vmem [resolvable:$true] %s1244
      %1247 = dma.vmem_to_hbm [thread:$0]  %s1245, 128, %s4, [#allocation4]
    $region25: #{tpu_custom_call.1} parent=1 // pred_fallthru
      _
    // Predicated region
    $region26: #{tpu_custom_call.1} parent=1 // pred_check
      _
    $region27: #{tpu_custom_call.1} parent=1 // pred_check_branch
      %1249 = sbr.rel (0) target = $region29
    $region28: #{tpu_custom_call.1} parent=1 // pred_region
      _
    $region29: #{tpu_custom_call.1} parent=1 // pred_fallthru
      _
    // Predicated region
    $region30: #{tpu_custom_call.1} parent=1 // pred_check
      _
    $region31: #{tpu_custom_call.1} parent=1 // pred_check_branch
      %1251 = sbr.rel (0) target = $region33
    $region32: #{tpu_custom_call.1} parent=1 // pred_region
      %1252 = dma.done [#allocation4], 128
    $region33: #{tpu_custom_call.1} parent=1 // pred_fallthru
      _
    %1253 = vsyncpa [#allocation3], 1
    %1254 = vsyncpa [#allocation4], 1

</llo_original>
